<compile_context>
chip_gen: v6e
topology: v6e:2x2x1
jax: 0.10.0
libtpu: 0.0.40
codegen_flags: <defaults>
</compile_context>

<pallas_src>
import jax
import jax.numpy as jnp
from jax.experimental import pallas as pl
from jax.experimental.pallas import tpu as pltpu


def _repblock_kernel(x_ref, w_ref, b_ref, a_ref, o_ref, p_ref):
    """Fused 3x3 conv (3x3 + 3x1 + 1x3 branches) + bias + per-channel PReLU.

    x_ref: (1, Cin, H+2, W+2)   VMEM, zero-padded image of one batch element
    w_ref: (co_blk, Cin*9)      VMEM, fused weights (k = ci*9 + ky*3 + kx)
    b_ref: (co_blk, 1)          VMEM, fused bias
    a_ref: (co_blk, 1)          VMEM, PReLU alpha
    o_ref: (1, co_blk, TH*W)    VMEM, flattened H-tile of the output
    p_ref: (Cin*9, TH, W)       VMEM scratch, im2col patches for this tile
    """
    Cin = x_ref.shape[1]
    W = x_ref.shape[3] - 2
    K9, TH = p_ref.shape[0], p_ref.shape[1]
    thw = o_ref.shape[2]                         # == TH * W

    h0 = pl.multiple_of(pl.program_id(2) * TH, TH)   # top row of this H tile

    # im2col: stream the 9 shifted taps of every input channel into scratch.
    # Row taps (ky) are sublane slices of the padded image; column taps (kx)
    # are static lane slices of one already-loaded (TH, W+2) strip, so at most
    # a single strip is live per (ci, ky).
    # TODO(synk): lax.fori_loop over ci + K-tiling for large Cin.
    for ci in range(Cin):
        for ky in range(3):
            strip = x_ref[0, ci, pl.ds(h0 + ky, TH), :]        # (TH, W+2)
            for kx in range(3):
                p_ref[(ci * 3 + ky) * 3 + kx] = strip[:, kx:kx + W]

    # One MXU contraction over K = Cin*9 for the whole H tile.
    patches = p_ref[...].reshape(K9, thw)                      # (Cin*9, TH*W)
    acc = jnp.dot(w_ref[...], patches,
                  preferred_element_type=jnp.float32)          # (co_blk, TH*W)

    y = acc + b_ref[...]                                       # bias broadcast
    y = jnp.where(y >= 0.0, y, a_ref[...] * y)                 # per-channel PReLU
    o_ref[0] = y.astype(o_ref.dtype)


def _choose_h_tile(H, W):
    """Smallest H tile dividing H whose flattened lane extent (TH*W) is a dense
    multiple of 128 and reasonably large; falls back to the full image when no
    aligned tile exists."""
    aligned = [th for th in range(1, H + 1)
               if H % th == 0 and (th * W) % 128 == 0]
    if not aligned:
        return H                     # unaligned shape: whole image per step
    for th in aligned:
        if th * W >= 4096:
            return th
    return aligned[0]


def _choose_co_block(Cout):
    """Cout tile: whole Cout for small models, otherwise a multiple of 8."""
    if Cout <= 64:
        return Cout
    for cand in (64, 32, 16, 8):
        if Cout % cand == 0:
            return cand
    return Cout


def _vmem_limit_bytes():
    """Generation-aware VMEM budget: ~75% of physical, capped at 100 MiB
    (-> ~48 MiB on v7x (64 MiB VMEM), ~96 MiB on v5e/v6e (128 MiB))."""
    try:
        cap = pltpu.get_tpu_info().vmem_capacity_bytes
    except Exception:
        cap = 64 * 1024 * 1024       # conservative (v7x-sized) fallback
    return int(min(cap * 3 // 4, 100 * 1024 * 1024))


def fuse_branch_params(w3x3, b3x3, w3x1, b3x1, w1x3, b1x3):
    """One-time exact reparameterization of the three live branches into a
    single 3x3 conv, returned as a (Cout, Cin*9) matmul weight + (Cout,) bias."""
    w = w3x3
    w = w.at[:, :, :, 1:2].add(w3x1)      # 3x1 (padding (1,0)) -> center column
    w = w.at[:, :, 1:2, :].add(w1x3)      # 1x3 (padding (0,1)) -> center row
    Cout, Cin = w.shape[0], w.shape[1]
    return (w.reshape(Cout, Cin * 9).astype(jnp.float32),
            (b3x3 + b3x1 + b1x3).astype(jnp.float32))


@jax.jit
def repblock_forward(x_nchw, w_fused, b_fused, alpha):
    """RepBlock forward (non-deploy semantics).  x_nchw: (N, Cin, H, W) f32."""
    N, Cin, H, W = x_nchw.shape
    Cout, K9 = w_fused.shape
    assert K9 == Cin * 9

    TH = _choose_h_tile(H, W)
    n_h = H // TH
    co_blk = _choose_co_block(Cout)
    n_co = Cout // co_blk

    x_pad = jnp.pad(x_nchw, ((0, 0), (0, 0), (1, 1), (1, 1)))   # zero-pad once
    b2 = b_fused.reshape(Cout, 1)
    a2 = alpha.astype(jnp.float32).reshape(Cout, 1)

    out_flat = pl.pallas_call(
        _repblock_kernel,
        out_shape=jax.ShapeDtypeStruct((N, Cout, H * W), x_nchw.dtype),
        grid=(N, n_co, n_h),
        in_specs=[
            # Whole padded image per batch element; index_map independent of
            # (c, j) so it stays VMEM-resident across those axes.
            pl.BlockSpec((1, Cin, H + 2, W + 2), lambda n, c, j: (n, 0, 0, 0)),
            # Weight / bias / alpha tiles in VMEM, blocked along Cout only
            # (static in-kernel indexing, resident across n and j).
            pl.BlockSpec((co_blk, K9), lambda n, c, j: (c, 0)),
            pl.BlockSpec((co_blk, 1), lambda n, c, j: (c, 0)),
            pl.BlockSpec((co_blk, 1), lambda n, c, j: (c, 0)),
        ],
        # Lane-dense output block: TH*W is a multiple of 128 whenever possible.
        out_specs=pl.BlockSpec((1, co_blk, TH * W), lambda n, c, j: (n, c, j)),
        scratch_shapes=[pltpu.VMEM((K9, TH, W), jnp.float32)],
        compiler_params=pltpu.CompilerParams(
            dimension_semantics=("parallel", "parallel", "parallel"),
            vmem_limit_bytes=_vmem_limit_bytes(),
        ),
    )(x_pad, w_fused, b2, a2)

    return out_flat.reshape(N, Cout, H, W)


def _reference_forward(x, w3x3, b3x3, w3x1, b3x1, w1x3, b1x3, alpha):
    """Pure-JAX reference with the same (dangling '+') semantics."""
    def conv(x, w, b, pad):
        y = jax.lax.conv_general_dilated(
            x, w, window_strides=(1, 1), padding=pad,
            dimension_numbers=("NCHW", "OIHW", "NCHW"),
            precision=jax.lax.Precision.HIGHEST)
        return y + b.reshape(1, -1, 1, 1)

    y = (conv(x, w3x3, b3x3, ((1, 1), (1, 1)))
         + conv(x, w3x1, b3x1, ((1, 1), (0, 0)))
         + conv(x, w1x3, b1x3, ((0, 0), (1, 1))))
    return jnp.where(y >= 0, y, alpha.reshape(1, -1, 1, 1) * y)


def _conv_params(key, cout, cin, kh, kw):
    """Deterministic init mimicking PyTorch Conv2d defaults (uniform bounds)."""
    kw_, kb_ = jax.random.split(key)
    bound = 1.0 / jnp.sqrt(float(cin * kh * kw))
    w = jax.random.uniform(kw_, (cout, cin, kh, kw), jnp.float32, -bound, bound)
    b = jax.random.uniform(kb_, (cout,), jnp.float32, -bound, bound)
    return w, b


if __name__ == "__main__":
    # Small shapes consistent with the module: N=2, Cin=Cout=4, H=W=16.
    N, Cin, Cout, H, W = 2, 4, 4, 16, 16

    root = jax.random.PRNGKey(0)
    kx, k33, k31, k13 = jax.random.split(root, 4)

    x = jax.random.normal(kx, (N, Cin, H, W), jnp.float32)
    w3x3, b3x3 = _conv_params(k33, Cout, Cin, 3, 3)
    w3x1, b3x1 = _conv_params(k31, Cout, Cin, 3, 1)
    w1x3, b1x3 = _conv_params(k13, Cout, Cin, 1, 3)
    alpha = jnp.full((Cout,), 0.25, jnp.float32)     # nn.PReLU default init

    # Branch fusion done once, outside the forward path.
    w_fused, b_fused = fuse_branch_params(w3x3, b3x3, w3x1, b3x1, w1x3, b1x3)

    y = repblock_forward(x, w_fused, b_fused, alpha)
    jax.block_until_ready(y)
    assert y.shape == (N, Cout, H, W), y.shape

    # Correctness check against a pure-JAX reference (same semantics).
    # Typical error is ~1e-6; the bound is kept loose enough to also cover a
    # lower-precision MXU pass configuration for the f32 matmul.
    y_ref = _reference_forward(x, w3x3, b3x3, w3x1, b3x1, w1x3, b1x3, alpha)
    max_err = float(jnp.max(jnp.abs(y - y_ref)))
    assert max_err < 1e-2, f"mismatch vs reference: max abs err = {max_err}"

    print("KERNEL_OK")
</pallas_src>

<mosaic_0001>
module attributes {stable_mosaic.version = 11 : i64} {
  func.func @_repblock_kernel(%arg0: i32, %arg1: i32, %arg2: i32, %arg3: memref<1x4x18x18xf32, #tpu.memory_space<vmem>>, %arg4: memref<4x36xf32, #tpu.memory_space<vmem>>, %arg5: memref<4x1xf32, #tpu.memory_space<vmem>>, %arg6: memref<4x1xf32, #tpu.memory_space<vmem>>, %arg7: memref<1x4x128xf32, #tpu.memory_space<vmem>>, %arg8: memref<36x8x16xf32, #tpu.memory_space<vmem>>) attributes {dimension_semantics = [#tpu.dimension_semantics<parallel>, #tpu.dimension_semantics<parallel>, #tpu.dimension_semantics<parallel>], iteration_bounds = array<i64: 2, 1, 2>, scalar_prefetch = 0 : i64, scratch_operands = 1 : i64, tpu.core_type = #tpu.core_type<tc>, window_params = [{transform_indices = @transform_0, window_bounds = array<i64: 1, 4, 18, 18>}, {transform_indices = @transform_1, window_bounds = array<i64: 4, 36>}, {transform_indices = @transform_2, window_bounds = array<i64: 4, 1>}, {transform_indices = @transform_3, window_bounds = array<i64: 4, 1>}, {transform_indices = @transform_4, window_bounds = array<i64: 1, 4, 128>}]} {
    %c8_i32 = arith.constant 8 : i32
    %0 = arith.muli %arg2, %c8_i32 : i32
    %1 = tpu.assume_multiple %0, 8 : i32
    %c0_i32 = arith.constant 0 : i32
    %2 = arith.addi %1, %c0_i32 : i32
    %c0 = arith.constant 0 : index
    %c0_0 = arith.constant 0 : index
    %3 = arith.index_cast %2 : i32 to index
    %c0_1 = arith.constant 0 : index
    %4 = vector.load %arg3[%c0, %c0_0, %3, %c0_1] : memref<1x4x18x18xf32, #tpu.memory_space<vmem>>, vector<1x1x8x18xf32>
    %5 = vector.shape_cast %4 : vector<1x1x8x18xf32> to vector<8x18xf32>
    %6 = vector.extract_strided_slice %5 {offsets = [0, 0], sizes = [8, 16], strides = [1, 1]} : vector<8x18xf32> to vector<8x16xf32>
    %c0_2 = arith.constant 0 : index
    %c0_3 = arith.constant 0 : index
    %c0_4 = arith.constant 0 : index
    %7 = vector.load %arg8[%c0_2, %c0_3, %c0_4] : memref<36x8x16xf32, #tpu.memory_space<vmem>>, vector<1x8x16xf32>
    %8 = vector.shape_cast %7 : vector<1x8x16xf32> to vector<8x16xf32>
    %9 = vector.shape_cast %6 : vector<8x16xf32> to vector<1x8x16xf32>
    tpu.vector_store %arg8[%c0_2, %c0_3, %c0_4], %9 {strides = array<i32>} : memref<36x8x16xf32, #tpu.memory_space<vmem>>, vector<1x8x16xf32>,
    %10 = vector.extract_strided_slice %5 {offsets = [0, 1], sizes = [8, 16], strides = [1, 1]} : vector<8x18xf32> to vector<8x16xf32>
    %c1 = arith.constant 1 : index
    %c0_5 = arith.constant 0 : index
    %c0_6 = arith.constant 0 : index
    %11 = vector.load %arg8[%c1, %c0_5, %c0_6] : memref<36x8x16xf32, #tpu.memory_space<vmem>>, vector<1x8x16xf32>
    %12 = vector.shape_cast %11 : vector<1x8x16xf32> to vector<8x16xf32>
    %13 = vector.shape_cast %10 : vector<8x16xf32> to vector<1x8x16xf32>
    tpu.vector_store %arg8[%c1, %c0_5, %c0_6], %13 {strides = array<i32>} : memref<36x8x16xf32, #tpu.memory_space<vmem>>, vector<1x8x16xf32>,
    %14 = vector.extract_strided_slice %5 {offsets = [0, 2], sizes = [8, 16], strides = [1, 1]} : vector<8x18xf32> to vector<8x16xf32>
    %c2 = arith.constant 2 : index
    %c0_7 = arith.constant 0 : index
    %c0_8 = arith.constant 0 : index
    %15 = vector.load %arg8[%c2, %c0_7, %c0_8] : memref<36x8x16xf32, #tpu.memory_space<vmem>>, vector<1x8x16xf32>
    %16 = vector.shape_cast %15 : vector<1x8x16xf32> to vector<8x16xf32>
    %17 = vector.shape_cast %14 : vector<8x16xf32> to vector<1x8x16xf32>
    tpu.vector_store %arg8[%c2, %c0_7, %c0_8], %17 {strides = array<i32>} : memref<36x8x16xf32, #tpu.memory_space<vmem>>, vector<1x8x16xf32>,
    %c1_i32 = arith.constant 1 : i32
    %18 = arith.addi %1, %c1_i32 : i32
    %c0_9 = arith.constant 0 : index
    %c0_10 = arith.constant 0 : index
    %19 = arith.index_cast %18 : i32 to index
    %c0_11 = arith.constant 0 : index
    %20 = vector.load %arg3[%c0_9, %c0_10, %19, %c0_11] : memref<1x4x18x18xf32, #tpu.memory_space<vmem>>, vector<1x1x8x18xf32>
    %21 = vector.shape_cast %20 : vector<1x1x8x18xf32> to vector<8x18xf32>
    %22 = vector.extract_strided_slice %21 {offsets = [0, 0], sizes = [8, 16], strides = [1, 1]} : vector<8x18xf32> to vector<8x16xf32>
    %c3 = arith.constant 3 : index
    %c0_12 = arith.constant 0 : index
    %c0_13 = arith.constant 0 : index
    %23 = vector.load %arg8[%c3, %c0_12, %c0_13] : memref<36x8x16xf32, #tpu.memory_space<vmem>>, vector<1x8x16xf32>
    %24 = vector.shape_cast %23 : vector<1x8x16xf32> to vector<8x16xf32>
    %25 = vector.shape_cast %22 : vector<8x16xf32> to vector<1x8x16xf32>
    tpu.vector_store %arg8[%c3, %c0_12, %c0_13], %25 {strides = array<i32>} : memref<36x8x16xf32, #tpu.memory_space<vmem>>, vector<1x8x16xf32>,
    %26 = vector.extract_strided_slice %21 {offsets = [0, 1], sizes = [8, 16], strides = [1, 1]} : vector<8x18xf32> to vector<8x16xf32>
    %c4 = arith.constant 4 : index
    %c0_14 = arith.constant 0 : index
    %c0_15 = arith.constant 0 : index
    %27 = vector.load %arg8[%c4, %c0_14, %c0_15] : memref<36x8x16xf32, #tpu.memory_space<vmem>>, vector<1x8x16xf32>
    %28 = vector.shape_cast %27 : vector<1x8x16xf32> to vector<8x16xf32>
    %29 = vector.shape_cast %26 : vector<8x16xf32> to vector<1x8x16xf32>
    tpu.vector_store %arg8[%c4, %c0_14, %c0_15], %29 {strides = array<i32>} : memref<36x8x16xf32, #tpu.memory_space<vmem>>, vector<1x8x16xf32>,
    %30 = vector.extract_strided_slice %21 {offsets = [0, 2], sizes = [8, 16], strides = [1, 1]} : vector<8x18xf32> to vector<8x16xf32>
    %c5 = arith.constant 5 : index
    %c0_16 = arith.constant 0 : index
    %c0_17 = arith.constant 0 : index
    %31 = vector.load %arg8[%c5, %c0_16, %c0_17] : memref<36x8x16xf32, #tpu.memory_space<vmem>>, vector<1x8x16xf32>
    %32 = vector.shape_cast %31 : vector<1x8x16xf32> to vector<8x16xf32>
    %33 = vector.shape_cast %30 : vector<8x16xf32> to vector<1x8x16xf32>
    tpu.vector_store %arg8[%c5, %c0_16, %c0_17], %33 {strides = array<i32>} : memref<36x8x16xf32, #tpu.memory_space<vmem>>, vector<1x8x16xf32>,
    %c2_i32 = arith.constant 2 : i32
    %34 = arith.addi %1, %c2_i32 : i32
    %c0_18 = arith.constant 0 : index
    %c0_19 = arith.constant 0 : index
    %35 = arith.index_cast %34 : i32 to index
    %c0_20 = arith.constant 0 : index
    %36 = vector.load %arg3[%c0_18, %c0_19, %35, %c0_20] : memref<1x4x18x18xf32, #tpu.memory_space<vmem>>, vector<1x1x8x18xf32>
    %37 = vector.shape_cast %36 : vector<1x1x8x18xf32> to vector<8x18xf32>
    %38 = vector.extract_strided_slice %37 {offsets = [0, 0], sizes = [8, 16], strides = [1, 1]} : vector<8x18xf32> to vector<8x16xf32>
    %c6 = arith.constant 6 : index
    %c0_21 = arith.constant 0 : index
    %c0_22 = arith.constant 0 : index
    %39 = vector.load %arg8[%c6, %c0_21, %c0_22] : memref<36x8x16xf32, #tpu.memory_space<vmem>>, vector<1x8x16xf32>
    %40 = vector.shape_cast %39 : vector<1x8x16xf32> to vector<8x16xf32>
    %41 = vector.shape_cast %38 : vector<8x16xf32> to vector<1x8x16xf32>
    tpu.vector_store %arg8[%c6, %c0_21, %c0_22], %41 {strides = array<i32>} : memref<36x8x16xf32, #tpu.memory_space<vmem>>, vector<1x8x16xf32>,
    %42 = vector.extract_strided_slice %37 {offsets = [0, 1], sizes = [8, 16], strides = [1, 1]} : vector<8x18xf32> to vector<8x16xf32>
    %c7 = arith.constant 7 : index
    %c0_23 = arith.constant 0 : index
    %c0_24 = arith.constant 0 : index
    %43 = vector.load %arg8[%c7, %c0_23, %c0_24] : memref<36x8x16xf32, #tpu.memory_space<vmem>>, vector<1x8x16xf32>
    %44 = vector.shape_cast %43 : vector<1x8x16xf32> to vector<8x16xf32>
    %45 = vector.shape_cast %42 : vector<8x16xf32> to vector<1x8x16xf32>
    tpu.vector_store %arg8[%c7, %c0_23, %c0_24], %45 {strides = array<i32>} : memref<36x8x16xf32, #tpu.memory_space<vmem>>, vector<1x8x16xf32>,
    %46 = vector.extract_strided_slice %37 {offsets = [0, 2], sizes = [8, 16], strides = [1, 1]} : vector<8x18xf32> to vector<8x16xf32>
    %c8 = arith.constant 8 : index
    %c0_25 = arith.constant 0 : index
    %c0_26 = arith.constant 0 : index
    %47 = vector.load %arg8[%c8, %c0_25, %c0_26] : memref<36x8x16xf32, #tpu.memory_space<vmem>>, vector<1x8x16xf32>
    %48 = vector.shape_cast %47 : vector<1x8x16xf32> to vector<8x16xf32>
    %49 = vector.shape_cast %46 : vector<8x16xf32> to vector<1x8x16xf32>
    tpu.vector_store %arg8[%c8, %c0_25, %c0_26], %49 {strides = array<i32>} : memref<36x8x16xf32, #tpu.memory_space<vmem>>, vector<1x8x16xf32>,
    %c0_i32_27 = arith.constant 0 : i32
    %50 = arith.addi %1, %c0_i32_27 : i32
    %c0_28 = arith.constant 0 : index
    %c1_29 = arith.constant 1 : index
    %51 = arith.index_cast %50 : i32 to index
    %c0_30 = arith.constant 0 : index
    %52 = vector.load %arg3[%c0_28, %c1_29, %51, %c0_30] : memref<1x4x18x18xf32, #tpu.memory_space<vmem>>, vector<1x1x8x18xf32>
    %53 = vector.shape_cast %52 : vector<1x1x8x18xf32> to vector<8x18xf32>
    %54 = vector.extract_strided_slice %53 {offsets = [0, 0], sizes = [8, 16], strides = [1, 1]} : vector<8x18xf32> to vector<8x16xf32>
    %c9 = arith.constant 9 : index
    %c0_31 = arith.constant 0 : index
    %c0_32 = arith.constant 0 : index
    %55 = vector.load %arg8[%c9, %c0_31, %c0_32] : memref<36x8x16xf32, #tpu.memory_space<vmem>>, vector<1x8x16xf32>
    %56 = vector.shape_cast %55 : vector<1x8x16xf32> to vector<8x16xf32>
    %57 = vector.shape_cast %54 : vector<8x16xf32> to vector<1x8x16xf32>
    tpu.vector_store %arg8[%c9, %c0_31, %c0_32], %57 {strides = array<i32>} : memref<36x8x16xf32, #tpu.memory_space<vmem>>, vector<1x8x16xf32>,
    %58 = vector.extract_strided_slice %53 {offsets = [0, 1], sizes = [8, 16], strides = [1, 1]} : vector<8x18xf32> to vector<8x16xf32>
    %c10 = arith.constant 10 : index
    %c0_33 = arith.constant 0 : index
    %c0_34 = arith.constant 0 : index
    %59 = vector.load %arg8[%c10, %c0_33, %c0_34] : memref<36x8x16xf32, #tpu.memory_space<vmem>>, vector<1x8x16xf32>
    %60 = vector.shape_cast %59 : vector<1x8x16xf32> to vector<8x16xf32>
    %61 = vector.shape_cast %58 : vector<8x16xf32> to vector<1x8x16xf32>
    tpu.vector_store %arg8[%c10, %c0_33, %c0_34], %61 {strides = array<i32>} : memref<36x8x16xf32, #tpu.memory_space<vmem>>, vector<1x8x16xf32>,
    %62 = vector.extract_strided_slice %53 {offsets = [0, 2], sizes = [8, 16], strides = [1, 1]} : vector<8x18xf32> to vector<8x16xf32>
    %c11 = arith.constant 11 : index
    %c0_35 = arith.constant 0 : index
    %c0_36 = arith.constant 0 : index
    %63 = vector.load %arg8[%c11, %c0_35, %c0_36] : memref<36x8x16xf32, #tpu.memory_space<vmem>>, vector<1x8x16xf32>
    %64 = vector.shape_cast %63 : vector<1x8x16xf32> to vector<8x16xf32>
    %65 = vector.shape_cast %62 : vector<8x16xf32> to vector<1x8x16xf32>
    tpu.vector_store %arg8[%c11, %c0_35, %c0_36], %65 {strides = array<i32>} : memref<36x8x16xf32, #tpu.memory_space<vmem>>, vector<1x8x16xf32>,
    %c1_i32_37 = arith.constant 1 : i32
    %66 = arith.addi %1, %c1_i32_37 : i32
    %c0_38 = arith.constant 0 : index
    %c1_39 = arith.constant 1 : index
    %67 = arith.index_cast %66 : i32 to index
    %c0_40 = arith.constant 0 : index
    %68 = vector.load %arg3[%c0_38, %c1_39, %67, %c0_40] : memref<1x4x18x18xf32, #tpu.memory_space<vmem>>, vector<1x1x8x18xf32>
    %69 = vector.shape_cast %68 : vector<1x1x8x18xf32> to vector<8x18xf32>
    %70 = vector.extract_strided_slice %69 {offsets = [0, 0], sizes = [8, 16], strides = [1, 1]} : vector<8x18xf32> to vector<8x16xf32>
    %c12 = arith.constant 12 : index
    %c0_41 = arith.constant 0 : index
    %c0_42 = arith.constant 0 : index
    %71 = vector.load %arg8[%c12, %c0_41, %c0_42] : memref<36x8x16xf32, #tpu.memory_space<vmem>>, vector<1x8x16xf32>
    %72 = vector.shape_cast %71 : vector<1x8x16xf32> to vector<8x16xf32>
    %73 = vector.shape_cast %70 : vector<8x16xf32> to vector<1x8x16xf32>
    tpu.vector_store %arg8[%c12, %c0_41, %c0_42], %73 {strides = array<i32>} : memref<36x8x16xf32, #tpu.memory_space<vmem>>, vector<1x8x16xf32>,
    %74 = vector.extract_strided_slice %69 {offsets = [0, 1], sizes = [8, 16], strides = [1, 1]} : vector<8x18xf32> to vector<8x16xf32>
    %c13 = arith.constant 13 : index
    %c0_43 = arith.constant 0 : index
    %c0_44 = arith.constant 0 : index
    %75 = vector.load %arg8[%c13, %c0_43, %c0_44] : memref<36x8x16xf32, #tpu.memory_space<vmem>>, vector<1x8x16xf32>
    %76 = vector.shape_cast %75 : vector<1x8x16xf32> to vector<8x16xf32>
    %77 = vector.shape_cast %74 : vector<8x16xf32> to vector<1x8x16xf32>
    tpu.vector_store %arg8[%c13, %c0_43, %c0_44], %77 {strides = array<i32>} : memref<36x8x16xf32, #tpu.memory_space<vmem>>, vector<1x8x16xf32>,
    %78 = vector.extract_strided_slice %69 {offsets = [0, 2], sizes = [8, 16], strides = [1, 1]} : vector<8x18xf32> to vector<8x16xf32>
    %c14 = arith.constant 14 : index
    %c0_45 = arith.constant 0 : index
    %c0_46 = arith.constant 0 : index
    %79 = vector.load %arg8[%c14, %c0_45, %c0_46] : memref<36x8x16xf32, #tpu.memory_space<vmem>>, vector<1x8x16xf32>
    %80 = vector.shape_cast %79 : vector<1x8x16xf32> to vector<8x16xf32>
    %81 = vector.shape_cast %78 : vector<8x16xf32> to vector<1x8x16xf32>
    tpu.vector_store %arg8[%c14, %c0_45, %c0_46], %81 {strides = array<i32>} : memref<36x8x16xf32, #tpu.memory_space<vmem>>, vector<1x8x16xf32>,
    %c2_i32_47 = arith.constant 2 : i32
    %82 = arith.addi %1, %c2_i32_47 : i32
    %c0_48 = arith.constant 0 : index
    %c1_49 = arith.constant 1 : index
    %83 = arith.index_cast %82 : i32 to index
    %c0_50 = arith.constant 0 : index
    %84 = vector.load %arg3[%c0_48, %c1_49, %83, %c0_50] : memref<1x4x18x18xf32, #tpu.memory_space<vmem>>, vector<1x1x8x18xf32>
    %85 = vector.shape_cast %84 : vector<1x1x8x18xf32> to vector<8x18xf32>
    %86 = vector.extract_strided_slice %85 {offsets = [0, 0], sizes = [8, 16], strides = [1, 1]} : vector<8x18xf32> to vector<8x16xf32>
    %c15 = arith.constant 15 : index
    %c0_51 = arith.constant 0 : index
    %c0_52 = arith.constant 0 : index
    %87 = vector.load %arg8[%c15, %c0_51, %c0_52] : memref<36x8x16xf32, #tpu.memory_space<vmem>>, vector<1x8x16xf32>
    %88 = vector.shape_cast %87 : vector<1x8x16xf32> to vector<8x16xf32>
    %89 = vector.shape_cast %86 : vector<8x16xf32> to vector<1x8x16xf32>
    tpu.vector_store %arg8[%c15, %c0_51, %c0_52], %89 {strides = array<i32>} : memref<36x8x16xf32, #tpu.memory_space<vmem>>, vector<1x8x16xf32>,
    %90 = vector.extract_strided_slice %85 {offsets = [0, 1], sizes = [8, 16], strides = [1, 1]} : vector<8x18xf32> to vector<8x16xf32>
    %c16 = arith.constant 16 : index
    %c0_53 = arith.constant 0 : index
    %c0_54 = arith.constant 0 : index
    %91 = vector.load %arg8[%c16, %c0_53, %c0_54] : memref<36x8x16xf32, #tpu.memory_space<vmem>>, vector<1x8x16xf32>
    %92 = vector.shape_cast %91 : vector<1x8x16xf32> to vector<8x16xf32>
    %93 = vector.shape_cast %90 : vector<8x16xf32> to vector<1x8x16xf32>
    tpu.vector_store %arg8[%c16, %c0_53, %c0_54], %93 {strides = array<i32>} : memref<36x8x16xf32, #tpu.memory_space<vmem>>, vector<1x8x16xf32>,
    %94 = vector.extract_strided_slice %85 {offsets = [0, 2], sizes = [8, 16], strides = [1, 1]} : vector<8x18xf32> to vector<8x16xf32>
    %c17 = arith.constant 17 : index
    %c0_55 = arith.constant 0 : index
    %c0_56 = arith.constant 0 : index
    %95 = vector.load %arg8[%c17, %c0_55, %c0_56] : memref<36x8x16xf32, #tpu.memory_space<vmem>>, vector<1x8x16xf32>
    %96 = vector.shape_cast %95 : vector<1x8x16xf32> to vector<8x16xf32>
    %97 = vector.shape_cast %94 : vector<8x16xf32> to vector<1x8x16xf32>
    tpu.vector_store %arg8[%c17, %c0_55, %c0_56], %97 {strides = array<i32>} : memref<36x8x16xf32, #tpu.memory_space<vmem>>, vector<1x8x16xf32>,
    %c0_i32_57 = arith.constant 0 : i32
    %98 = arith.addi %1, %c0_i32_57 : i32
    %c0_58 = arith.constant 0 : index
    %c2_59 = arith.constant 2 : index
    %99 = arith.index_cast %98 : i32 to index
    %c0_60 = arith.constant 0 : index
    %100 = vector.load %arg3[%c0_58, %c2_59, %99, %c0_60] : memref<1x4x18x18xf32, #tpu.memory_space<vmem>>, vector<1x1x8x18xf32>
    %101 = vector.shape_cast %100 : vector<1x1x8x18xf32> to vector<8x18xf32>
    %102 = vector.extract_strided_slice %101 {offsets = [0, 0], sizes = [8, 16], strides = [1, 1]} : vector<8x18xf32> to vector<8x16xf32>
    %c18 = arith.constant 18 : index
    %c0_61 = arith.constant 0 : index
    %c0_62 = arith.constant 0 : index
    %103 = vector.load %arg8[%c18, %c0_61, %c0_62] : memref<36x8x16xf32, #tpu.memory_space<vmem>>, vector<1x8x16xf32>
    %104 = vector.shape_cast %103 : vector<1x8x16xf32> to vector<8x16xf32>
    %105 = vector.shape_cast %102 : vector<8x16xf32> to vector<1x8x16xf32>
    tpu.vector_store %arg8[%c18, %c0_61, %c0_62], %105 {strides = array<i32>} : memref<36x8x16xf32, #tpu.memory_space<vmem>>, vector<1x8x16xf32>,
    %106 = vector.extract_strided_slice %101 {offsets = [0, 1], sizes = [8, 16], strides = [1, 1]} : vector<8x18xf32> to vector<8x16xf32>
    %c19 = arith.constant 19 : index
    %c0_63 = arith.constant 0 : index
    %c0_64 = arith.constant 0 : index
    %107 = vector.load %arg8[%c19, %c0_63, %c0_64] : memref<36x8x16xf32, #tpu.memory_space<vmem>>, vector<1x8x16xf32>
    %108 = vector.shape_cast %107 : vector<1x8x16xf32> to vector<8x16xf32>
    %109 = vector.shape_cast %106 : vector<8x16xf32> to vector<1x8x16xf32>
    tpu.vector_store %arg8[%c19, %c0_63, %c0_64], %109 {strides = array<i32>} : memref<36x8x16xf32, #tpu.memory_space<vmem>>, vector<1x8x16xf32>,
    %110 = vector.extract_strided_slice %101 {offsets = [0, 2], sizes = [8, 16], strides = [1, 1]} : vector<8x18xf32> to vector<8x16xf32>
    %c20 = arith.constant 20 : index
    %c0_65 = arith.constant 0 : index
    %c0_66 = arith.constant 0 : index
    %111 = vector.load %arg8[%c20, %c0_65, %c0_66] : memref<36x8x16xf32, #tpu.memory_space<vmem>>, vector<1x8x16xf32>
    %112 = vector.shape_cast %111 : vector<1x8x16xf32> to vector<8x16xf32>
    %113 = vector.shape_cast %110 : vector<8x16xf32> to vector<1x8x16xf32>
    tpu.vector_store %arg8[%c20, %c0_65, %c0_66], %113 {strides = array<i32>} : memref<36x8x16xf32, #tpu.memory_space<vmem>>, vector<1x8x16xf32>,
    %c1_i32_67 = arith.constant 1 : i32
    %114 = arith.addi %1, %c1_i32_67 : i32
    %c0_68 = arith.constant 0 : index
    %c2_69 = arith.constant 2 : index
    %115 = arith.index_cast %114 : i32 to index
    %c0_70 = arith.constant 0 : index
    %116 = vector.load %arg3[%c0_68, %c2_69, %115, %c0_70] : memref<1x4x18x18xf32, #tpu.memory_space<vmem>>, vector<1x1x8x18xf32>
    %117 = vector.shape_cast %116 : vector<1x1x8x18xf32> to vector<8x18xf32>
    %118 = vector.extract_strided_slice %117 {offsets = [0, 0], sizes = [8, 16], strides = [1, 1]} : vector<8x18xf32> to vector<8x16xf32>
    %c21 = arith.constant 21 : index
    %c0_71 = arith.constant 0 : index
    %c0_72 = arith.constant 0 : index
    %119 = vector.load %arg8[%c21, %c0_71, %c0_72] : memref<36x8x16xf32, #tpu.memory_space<vmem>>, vector<1x8x16xf32>
    %120 = vector.shape_cast %119 : vector<1x8x16xf32> to vector<8x16xf32>
    %121 = vector.shape_cast %118 : vector<8x16xf32> to vector<1x8x16xf32>
    tpu.vector_store %arg8[%c21, %c0_71, %c0_72], %121 {strides = array<i32>} : memref<36x8x16xf32, #tpu.memory_space<vmem>>, vector<1x8x16xf32>,
    %122 = vector.extract_strided_slice %117 {offsets = [0, 1], sizes = [8, 16], strides = [1, 1]} : vector<8x18xf32> to vector<8x16xf32>
    %c22 = arith.constant 22 : index
    %c0_73 = arith.constant 0 : index
    %c0_74 = arith.constant 0 : index
    %123 = vector.load %arg8[%c22, %c0_73, %c0_74] : memref<36x8x16xf32, #tpu.memory_space<vmem>>, vector<1x8x16xf32>
    %124 = vector.shape_cast %123 : vector<1x8x16xf32> to vector<8x16xf32>
    %125 = vector.shape_cast %122 : vector<8x16xf32> to vector<1x8x16xf32>
    tpu.vector_store %arg8[%c22, %c0_73, %c0_74], %125 {strides = array<i32>} : memref<36x8x16xf32, #tpu.memory_space<vmem>>, vector<1x8x16xf32>,
    %126 = vector.extract_strided_slice %117 {offsets = [0, 2], sizes = [8, 16], strides = [1, 1]} : vector<8x18xf32> to vector<8x16xf32>
    %c23 = arith.constant 23 : index
    %c0_75 = arith.constant 0 : index
    %c0_76 = arith.constant 0 : index
    %127 = vector.load %arg8[%c23, %c0_75, %c0_76] : memref<36x8x16xf32, #tpu.memory_space<vmem>>, vector<1x8x16xf32>
    %128 = vector.shape_cast %127 : vector<1x8x16xf32> to vector<8x16xf32>
    %129 = vector.shape_cast %126 : vector<8x16xf32> to vector<1x8x16xf32>
    tpu.vector_store %arg8[%c23, %c0_75, %c0_76], %129 {strides = array<i32>} : memref<36x8x16xf32, #tpu.memory_space<vmem>>, vector<1x8x16xf32>,
    %c2_i32_77 = arith.constant 2 : i32
    %130 = arith.addi %1, %c2_i32_77 : i32
    %c0_78 = arith.constant 0 : index
    %c2_79 = arith.constant 2 : index
    %131 = arith.index_cast %130 : i32 to index
    %c0_80 = arith.constant 0 : index
    %132 = vector.load %arg3[%c0_78, %c2_79, %131, %c0_80] : memref<1x4x18x18xf32, #tpu.memory_space<vmem>>, vector<1x1x8x18xf32>
    %133 = vector.shape_cast %132 : vector<1x1x8x18xf32> to vector<8x18xf32>
    %134 = vector.extract_strided_slice %133 {offsets = [0, 0], sizes = [8, 16], strides = [1, 1]} : vector<8x18xf32> to vector<8x16xf32>
    %c24 = arith.constant 24 : index
    %c0_81 = arith.constant 0 : index
    %c0_82 = arith.constant 0 : index
    %135 = vector.load %arg8[%c24, %c0_81, %c0_82] : memref<36x8x16xf32, #tpu.memory_space<vmem>>, vector<1x8x16xf32>
    %136 = vector.shape_cast %135 : vector<1x8x16xf32> to vector<8x16xf32>
    %137 = vector.shape_cast %134 : vector<8x16xf32> to vector<1x8x16xf32>
    tpu.vector_store %arg8[%c24, %c0_81, %c0_82], %137 {strides = array<i32>} : memref<36x8x16xf32, #tpu.memory_space<vmem>>, vector<1x8x16xf32>,
    %138 = vector.extract_strided_slice %133 {offsets = [0, 1], sizes = [8, 16], strides = [1, 1]} : vector<8x18xf32> to vector<8x16xf32>
    %c25 = arith.constant 25 : index
    %c0_83 = arith.constant 0 : index
    %c0_84 = arith.constant 0 : index
    %139 = vector.load %arg8[%c25, %c0_83, %c0_84] : memref<36x8x16xf32, #tpu.memory_space<vmem>>, vector<1x8x16xf32>
    %140 = vector.shape_cast %139 : vector<1x8x16xf32> to vector<8x16xf32>
    %141 = vector.shape_cast %138 : vector<8x16xf32> to vector<1x8x16xf32>
    tpu.vector_store %arg8[%c25, %c0_83, %c0_84], %141 {strides = array<i32>} : memref<36x8x16xf32, #tpu.memory_space<vmem>>, vector<1x8x16xf32>,
    %142 = vector.extract_strided_slice %133 {offsets = [0, 2], sizes = [8, 16], strides = [1, 1]} : vector<8x18xf32> to vector<8x16xf32>
    %c26 = arith.constant 26 : index
    %c0_85 = arith.constant 0 : index
    %c0_86 = arith.constant 0 : index
    %143 = vector.load %arg8[%c26, %c0_85, %c0_86] : memref<36x8x16xf32, #tpu.memory_space<vmem>>, vector<1x8x16xf32>
    %144 = vector.shape_cast %143 : vector<1x8x16xf32> to vector<8x16xf32>
    %145 = vector.shape_cast %142 : vector<8x16xf32> to vector<1x8x16xf32>
    tpu.vector_store %arg8[%c26, %c0_85, %c0_86], %145 {strides = array<i32>} : memref<36x8x16xf32, #tpu.memory_space<vmem>>, vector<1x8x16xf32>,
    %c0_i32_87 = arith.constant 0 : i32
    %146 = arith.addi %1, %c0_i32_87 : i32
    %c0_88 = arith.constant 0 : index
    %c3_89 = arith.constant 3 : index
    %147 = arith.index_cast %146 : i32 to index
    %c0_90 = arith.constant 0 : index
    %148 = vector.load %arg3[%c0_88, %c3_89, %147, %c0_90] : memref<1x4x18x18xf32, #tpu.memory_space<vmem>>, vector<1x1x8x18xf32>
    %149 = vector.shape_cast %148 : vector<1x1x8x18xf32> to vector<8x18xf32>
    %150 = vector.extract_strided_slice %149 {offsets = [0, 0], sizes = [8, 16], strides = [1, 1]} : vector<8x18xf32> to vector<8x16xf32>
    %c27 = arith.constant 27 : index
    %c0_91 = arith.constant 0 : index
    %c0_92 = arith.constant 0 : index
    %151 = vector.load %arg8[%c27, %c0_91, %c0_92] : memref<36x8x16xf32, #tpu.memory_space<vmem>>, vector<1x8x16xf32>
    %152 = vector.shape_cast %151 : vector<1x8x16xf32> to vector<8x16xf32>
    %153 = vector.shape_cast %150 : vector<8x16xf32> to vector<1x8x16xf32>
    tpu.vector_store %arg8[%c27, %c0_91, %c0_92], %153 {strides = array<i32>} : memref<36x8x16xf32, #tpu.memory_space<vmem>>, vector<1x8x16xf32>,
    %154 = vector.extract_strided_slice %149 {offsets = [0, 1], sizes = [8, 16], strides = [1, 1]} : vector<8x18xf32> to vector<8x16xf32>
    %c28 = arith.constant 28 : index
    %c0_93 = arith.constant 0 : index
    %c0_94 = arith.constant 0 : index
    %155 = vector.load %arg8[%c28, %c0_93, %c0_94] : memref<36x8x16xf32, #tpu.memory_space<vmem>>, vector<1x8x16xf32>
    %156 = vector.shape_cast %155 : vector<1x8x16xf32> to vector<8x16xf32>
    %157 = vector.shape_cast %154 : vector<8x16xf32> to vector<1x8x16xf32>
    tpu.vector_store %arg8[%c28, %c0_93, %c0_94], %157 {strides = array<i32>} : memref<36x8x16xf32, #tpu.memory_space<vmem>>, vector<1x8x16xf32>,
    %158 = vector.extract_strided_slice %149 {offsets = [0, 2], sizes = [8, 16], strides = [1, 1]} : vector<8x18xf32> to vector<8x16xf32>
    %c29 = arith.constant 29 : index
    %c0_95 = arith.constant 0 : index
    %c0_96 = arith.constant 0 : index
    %159 = vector.load %arg8[%c29, %c0_95, %c0_96] : memref<36x8x16xf32, #tpu.memory_space<vmem>>, vector<1x8x16xf32>
    %160 = vector.shape_cast %159 : vector<1x8x16xf32> to vector<8x16xf32>
    %161 = vector.shape_cast %158 : vector<8x16xf32> to vector<1x8x16xf32>
    tpu.vector_store %arg8[%c29, %c0_95, %c0_96], %161 {strides = array<i32>} : memref<36x8x16xf32, #tpu.memory_space<vmem>>, vector<1x8x16xf32>,
    %c1_i32_97 = arith.constant 1 : i32
    %162 = arith.addi %1, %c1_i32_97 : i32
    %c0_98 = arith.constant 0 : index
    %c3_99 = arith.constant 3 : index
    %163 = arith.index_cast %162 : i32 to index
    %c0_100 = arith.constant 0 : index
    %164 = vector.load %arg3[%c0_98, %c3_99, %163, %c0_100] : memref<1x4x18x18xf32, #tpu.memory_space<vmem>>, vector<1x1x8x18xf32>
    %165 = vector.shape_cast %164 : vector<1x1x8x18xf32> to vector<8x18xf32>
    %166 = vector.extract_strided_slice %165 {offsets = [0, 0], sizes = [8, 16], strides = [1, 1]} : vector<8x18xf32> to vector<8x16xf32>
    %c30 = arith.constant 30 : index
    %c0_101 = arith.constant 0 : index
    %c0_102 = arith.constant 0 : index
    %167 = vector.load %arg8[%c30, %c0_101, %c0_102] : memref<36x8x16xf32, #tpu.memory_space<vmem>>, vector<1x8x16xf32>
    %168 = vector.shape_cast %167 : vector<1x8x16xf32> to vector<8x16xf32>
    %169 = vector.shape_cast %166 : vector<8x16xf32> to vector<1x8x16xf32>
    tpu.vector_store %arg8[%c30, %c0_101, %c0_102], %169 {strides = array<i32>} : memref<36x8x16xf32, #tpu.memory_space<vmem>>, vector<1x8x16xf32>,
    %170 = vector.extract_strided_slice %165 {offsets = [0, 1], sizes = [8, 16], strides = [1, 1]} : vector<8x18xf32> to vector<8x16xf32>
    %c31 = arith.constant 31 : index
    %c0_103 = arith.constant 0 : index
    %c0_104 = arith.constant 0 : index
    %171 = vector.load %arg8[%c31, %c0_103, %c0_104] : memref<36x8x16xf32, #tpu.memory_space<vmem>>, vector<1x8x16xf32>
    %172 = vector.shape_cast %171 : vector<1x8x16xf32> to vector<8x16xf32>
    %173 = vector.shape_cast %170 : vector<8x16xf32> to vector<1x8x16xf32>
    tpu.vector_store %arg8[%c31, %c0_103, %c0_104], %173 {strides = array<i32>} : memref<36x8x16xf32, #tpu.memory_space<vmem>>, vector<1x8x16xf32>,
    %174 = vector.extract_strided_slice %165 {offsets = [0, 2], sizes = [8, 16], strides = [1, 1]} : vector<8x18xf32> to vector<8x16xf32>
    %c32 = arith.constant 32 : index
    %c0_105 = arith.constant 0 : index
    %c0_106 = arith.constant 0 : index
    %175 = vector.load %arg8[%c32, %c0_105, %c0_106] : memref<36x8x16xf32, #tpu.memory_space<vmem>>, vector<1x8x16xf32>
    %176 = vector.shape_cast %175 : vector<1x8x16xf32> to vector<8x16xf32>
    %177 = vector.shape_cast %174 : vector<8x16xf32> to vector<1x8x16xf32>
    tpu.vector_store %arg8[%c32, %c0_105, %c0_106], %177 {strides = array<i32>} : memref<36x8x16xf32, #tpu.memory_space<vmem>>, vector<1x8x16xf32>,
    %c2_i32_107 = arith.constant 2 : i32
    %178 = arith.addi %1, %c2_i32_107 : i32
    %c0_108 = arith.constant 0 : index
    %c3_109 = arith.constant 3 : index
    %179 = arith.index_cast %178 : i32 to index
    %c0_110 = arith.constant 0 : index
    %180 = vector.load %arg3[%c0_108, %c3_109, %179, %c0_110] : memref<1x4x18x18xf32, #tpu.memory_space<vmem>>, vector<1x1x8x18xf32>
    %181 = vector.shape_cast %180 : vector<1x1x8x18xf32> to vector<8x18xf32>
    %182 = vector.extract_strided_slice %181 {offsets = [0, 0], sizes = [8, 16], strides = [1, 1]} : vector<8x18xf32> to vector<8x16xf32>
    %c33 = arith.constant 33 : index
    %c0_111 = arith.constant 0 : index
    %c0_112 = arith.constant 0 : index
    %183 = vector.load %arg8[%c33, %c0_111, %c0_112] : memref<36x8x16xf32, #tpu.memory_space<vmem>>, vector<1x8x16xf32>
    %184 = vector.shape_cast %183 : vector<1x8x16xf32> to vector<8x16xf32>
    %185 = vector.shape_cast %182 : vector<8x16xf32> to vector<1x8x16xf32>
    tpu.vector_store %arg8[%c33, %c0_111, %c0_112], %185 {strides = array<i32>} : memref<36x8x16xf32, #tpu.memory_space<vmem>>, vector<1x8x16xf32>,
    %186 = vector.extract_strided_slice %181 {offsets = [0, 1], sizes = [8, 16], strides = [1, 1]} : vector<8x18xf32> to vector<8x16xf32>
    %c34 = arith.constant 34 : index
    %c0_113 = arith.constant 0 : index
    %c0_114 = arith.constant 0 : index
    %187 = vector.load %arg8[%c34, %c0_113, %c0_114] : memref<36x8x16xf32, #tpu.memory_space<vmem>>, vector<1x8x16xf32>
    %188 = vector.shape_cast %187 : vector<1x8x16xf32> to vector<8x16xf32>
    %189 = vector.shape_cast %186 : vector<8x16xf32> to vector<1x8x16xf32>
    tpu.vector_store %arg8[%c34, %c0_113, %c0_114], %189 {strides = array<i32>} : memref<36x8x16xf32, #tpu.memory_space<vmem>>, vector<1x8x16xf32>,
    %190 = vector.extract_strided_slice %181 {offsets = [0, 2], sizes = [8, 16], strides = [1, 1]} : vector<8x18xf32> to vector<8x16xf32>
    %c35 = arith.constant 35 : index
    %c0_115 = arith.constant 0 : index
    %c0_116 = arith.constant 0 : index
    %191 = vector.load %arg8[%c35, %c0_115, %c0_116] : memref<36x8x16xf32, #tpu.memory_space<vmem>>, vector<1x8x16xf32>
    %192 = vector.shape_cast %191 : vector<1x8x16xf32> to vector<8x16xf32>
    %193 = vector.shape_cast %190 : vector<8x16xf32> to vector<1x8x16xf32>
    tpu.vector_store %arg8[%c35, %c0_115, %c0_116], %193 {strides = array<i32>} : memref<36x8x16xf32, #tpu.memory_space<vmem>>, vector<1x8x16xf32>,
    %c0_117 = arith.constant 0 : index
    %c0_118 = arith.constant 0 : index
    %c0_119 = arith.constant 0 : index
    %194 = vector.load %arg8[%c0_117, %c0_118, %c0_119] : memref<36x8x16xf32, #tpu.memory_space<vmem>>, vector<36x8x16xf32>
    %195 = vector.shape_cast %194 : vector<36x8x16xf32> to vector<36x128xf32>
    %c0_120 = arith.constant 0 : index
    %c0_121 = arith.constant 0 : index
    %196 = vector.load %arg4[%c0_120, %c0_121] : memref<4x36xf32, #tpu.memory_space<vmem>>, vector<4x36xf32>
    %cst = arith.constant dense<0.000000e+00> : vector<4x128xf32>
    %197 = tpu.matmul %196, %195, %cst {dimension_numbers = #tpu.dot_dimension_numbers<[1], [0], [0], [1], [0, 0, 1, 1], [], []>} : vector<4x36xf32>, vector<36x128xf32>, vector<4x128xf32> -> vector<4x128xf32>
    %c0_122 = arith.constant 0 : index
    %c0_123 = arith.constant 0 : index
    %198 = vector.load %arg5[%c0_122, %c0_123] : memref<4x1xf32, #tpu.memory_space<vmem>>, vector<4x1xf32>
    %199 = vector.broadcast %198 : vector<4x1xf32> to vector<4x128xf32>
    %200 = arith.addf %197, %199 : vector<4x128xf32>
    %cst_124 = arith.constant 0.000000e+00 : f32
    %201 = vector.broadcast %cst_124 : f32 to vector<4x128xf32>
    %202 = arith.cmpf oge, %200, %201 : vector<4x128xf32>
    %c0_125 = arith.constant 0 : index
    %c0_126 = arith.constant 0 : index
    %203 = vector.load %arg6[%c0_125, %c0_126] : memref<4x1xf32, #tpu.memory_space<vmem>>, vector<4x1xf32>
    %204 = vector.broadcast %203 : vector<4x1xf32> to vector<4x128xf32>
    %205 = arith.mulf %204, %200 : vector<4x128xf32>
    %206 = arith.select %202, %200, %205 : vector<4x128xi1>, vector<4x128xf32>
    %c0_127 = arith.constant 0 : index
    %c0_128 = arith.constant 0 : index
    %c0_129 = arith.constant 0 : index
    %207 = vector.load %arg7[%c0_127, %c0_128, %c0_129] : memref<1x4x128xf32, #tpu.memory_space<vmem>>, vector<1x4x128xf32>
    %208 = vector.shape_cast %207 : vector<1x4x128xf32> to vector<4x128xf32>
    %209 = vector.shape_cast %206 : vector<4x128xf32> to vector<1x4x128xf32>
    tpu.vector_store %arg7[%c0_127, %c0_128, %c0_129], %209 {strides = array<i32>} : memref<1x4x128xf32, #tpu.memory_space<vmem>>, vector<1x4x128xf32>,
    return
  }
  func.func @transform_0(%arg0: i32, %arg1: i32, %arg2: i32) -> (i32, i32, i32, i32) {
    %c0_i32 = arith.constant 0 : i32
    %c0_i32_0 = arith.constant 0 : i32
    %c0_i32_1 = arith.constant 0 : i32
    %c0_i32_2 = arith.constant 0 : i32
    return %arg0, %c0_i32, %c0_i32_0, %c0_i32_1 : i32, i32, i32, i32
  }
  func.func @transform_1(%arg0: i32, %arg1: i32, %arg2: i32) -> (i32, i32) {
    %c0_i32 = arith.constant 0 : i32
    %c0_i32_0 = arith.constant 0 : i32
    return %arg1, %c0_i32 : i32, i32
  }
  func.func @transform_2(%arg0: i32, %arg1: i32, %arg2: i32) -> (i32, i32) {
    %c0_i32 = arith.constant 0 : i32
    %c0_i32_0 = arith.constant 0 : i32
    return %arg1, %c0_i32 : i32, i32
  }
  func.func @transform_3(%arg0: i32, %arg1: i32, %arg2: i32) -> (i32, i32) {
    %c0_i32 = arith.constant 0 : i32
    %c0_i32_0 = arith.constant 0 : i32
    return %arg1, %c0_i32 : i32, i32
  }
  func.func @transform_4(%arg0: i32, %arg1: i32, %arg2: i32) -> (i32, i32, i32) {
    %c0_i32 = arith.constant 0 : i32
    return %arg0, %arg1, %arg2 : i32, i32, i32
  }
}

</mosaic_0001>

<llo_original>
// kernel: repblock_forward.1
$region0: #{repblock_forward.1}
  #allocation0 [shape = 'u32[]', space=smem, size = 0x4, offset = 0x4, fixed_abs, tag = 'smem constant byte address 0x4 - core index']
  #allocation1 [shape = 'u32[144,128]{1,0:T(1,128)}', space=vmem, size = 0x12000, scoped, tag = 'internal scratch']
  #allocation2 [shape = 'f32[36,8,16]{2,1,0:T(8,128)}', space=vmem, size = 0x24000, scoped, tag = 'scratch operand']
  %s0 = inlined_call_operand.vmem [shape: f32[2,4,18,18], index: 0, kind: input, shape index: {}]
  %s1 = inlined_call_operand.vmem [shape: f32[4,36], index: 1, kind: input, shape index: {}]
  %s2 = inlined_call_operand.vmem [shape: f32[4,1], index: 2, kind: input, shape index: {}]
  %s3 = inlined_call_operand.vmem [shape: f32[4,1], index: 3, kind: input, shape index: {}]
  %s4 = inlined_call_operand.vmem [shape: f32[2,4,256], index: 4, kind: output, shape index: {}]
  %s5 = sld [smem:[#allocation0]]
  $region49: #{repblock_forward.1} parent=0
    _
  %s7 = ssub.s32 1, %s5
  %s8 = scalar_select 0, %s7, %s5
  loop: start=0, step=1, limit=6
  $region2: #{repblock_forward.1} parent=0 // loop_pre_header
    _
  $region3: #{repblock_forward.1} parent=0 // loop_header
    %s10 = sphi 0, %s14
    %p11 = scmp.ge.s32.totalorder %s10, 6
    %s17 = sphi 0, %s36
    %s18 = sphi 0, %s32
    %s19 = sphi 0, %s28
    %s20 = sphi 0, %s17
    %s21 = sphi 0, %s18
    %s22 = sphi 0, %s19
    %s23 = sphi 0, %s20
    %s24 = sphi 0, %s21
    %s25 = sphi 0, %s22
    %s39 = sphi 0, %s41
    %s42 = sphi 0, %s39
    %s43 = sphi 0, %s42
    %s59 = sphi 0, %s43
    %s65 = sphi 0, %s67
    %s68 = sphi 0, %s65
    %s69 = sphi 0, %s68
    %s85 = sphi 0, %s69
    %s91 = sphi 0, %s93
    %s94 = sphi 0, %s91
    %s95 = sphi 0, %s94
    %s111 = sphi 0, %s95
    %s117 = sphi 0, %s119
    %s120 = sphi 0, %s117
    %s121 = sphi 0, %s120
    %s137 = sphi 0, %s121
    %s147 = sphi 0, %s149
    %s150 = sphi 0, %s147
    %s151 = sphi 0, %s150
    %s167 = sphi 0, %s151
  $region4: #{repblock_forward.1} parent=0 // loop_header_branch
    %13 = sbr.rel (%p11) target = $region8
  $region5: #{repblock_forward.1} parent=0 // loop_body
    %s15 = ssub.s32 %s10, 1
    %s16 = ssub.s32 %s10, 2
    %s26 = sadd.s32 1, %s19
    %p27 = scmp.ge.s32.totalorder %s26, 2
    %s28 = scalar_select %p27, 0, %s26
    %s29 = sadd.s32 1, %s18
    %s30 = scalar_select %p27, %s29, %s18
    %p31 = scmp.ge.s32.totalorder %s30, 1
    %s32 = scalar_select %p31, 0, %s30
    %s33 = sadd.s32 1, %s17
    %s34 = scalar_select %p31, %s33, %s17
    %p35 = scmp.ge.s32.totalorder %s34, 2
    %s36 = scalar_select %p35, 0, %s34
    %s37 = ssub.s32 %s17, %s36
    %p38 = scmp.eq.s32.totalorder %s37, 0
    %s40 = sadd.s32 %s39, 1
    %s41 = scalar_select %p38, %s39, %s40
    %p44 = pneg %p38
    %p45 = scmp.eq.s32.totalorder %s10, 3
    %p46 = por %p44, %p45
    %p47 = scmp.ne.s32.totalorder %s39, %s42
    %p48 = scmp.eq.s32.totalorder %s10, 0
    %p49 = por %p47, %p48
    %p50 = scmp.ne.s32.totalorder %s39, %s42
    %p51 = scmp.eq.s32.totalorder %s15, 3
    %p52 = por %p50, %p51
    %p53 = scmp.ne.s32.totalorder %s42, %s43
    %p54 = scmp.eq.s32.totalorder %s15, 0
    %p55 = por %p53, %p54
    %p56 = scmp.ne.s32.totalorder %s42, %s43
    %p57 = scmp.eq.s32.totalorder %s16, 3
    %p58 = por %p56, %p57
    %p60 = scmp.ne.s32.totalorder %s43, %s59
    %p61 = scmp.eq.s32.totalorder %s16, 0
    %p62 = por %p60, %p61
    %s63 = ssub.s32 %s18, %s32
    %p64 = scmp.eq.s32.totalorder %s63, 0
    %s66 = sadd.s32 %s65, 1
    %s67 = scalar_select %p64, %s65, %s66
    %p70 = pneg %p64
    %p71 = scmp.eq.s32.totalorder %s10, 3
    %p72 = por %p70, %p71
    %p73 = scmp.ne.s32.totalorder %s65, %s68
    %p74 = scmp.eq.s32.totalorder %s10, 0
    %p75 = por %p73, %p74
    %p76 = scmp.ne.s32.totalorder %s65, %s68
    %p77 = scmp.eq.s32.totalorder %s15, 3
    %p78 = por %p76, %p77
    %p79 = scmp.ne.s32.totalorder %s68, %s69
    %p80 = scmp.eq.s32.totalorder %s15, 0
    %p81 = por %p79, %p80
    %p82 = scmp.ne.s32.totalorder %s68, %s69
    %p83 = scmp.eq.s32.totalorder %s16, 3
    %p84 = por %p82, %p83
    %p86 = scmp.ne.s32.totalorder %s69, %s85
    %p87 = scmp.eq.s32.totalorder %s16, 0
    %p88 = por %p86, %p87
    %s89 = ssub.s32 %s18, %s32
    %p90 = scmp.eq.s32.totalorder %s89, 0
    %s92 = sadd.s32 %s91, 1
    %s93 = scalar_select %p90, %s91, %s92
    %p96 = pneg %p90
    %p97 = scmp.eq.s32.totalorder %s10, 3
    %p98 = por %p96, %p97
    %p99 = scmp.ne.s32.totalorder %s91, %s94
    %p100 = scmp.eq.s32.totalorder %s10, 0
    %p101 = por %p99, %p100
    %p102 = scmp.ne.s32.totalorder %s91, %s94
    %p103 = scmp.eq.s32.totalorder %s15, 3
    %p104 = por %p102, %p103
    %p105 = scmp.ne.s32.totalorder %s94, %s95
    %p106 = scmp.eq.s32.totalorder %s15, 0
    %p107 = por %p105, %p106
    %p108 = scmp.ne.s32.totalorder %s94, %s95
    %p109 = scmp.eq.s32.totalorder %s16, 3
    %p110 = por %p108, %p109
    %p112 = scmp.ne.s32.totalorder %s95, %s111
    %p113 = scmp.eq.s32.totalorder %s16, 0
    %p114 = por %p112, %p113
    %s115 = ssub.s32 %s18, %s32
    %p116 = scmp.eq.s32.totalorder %s115, 0
    %s118 = sadd.s32 %s117, 1
    %s119 = scalar_select %p116, %s117, %s118
    %p122 = pneg %p116
    %p123 = scmp.eq.s32.totalorder %s10, 3
    %p124 = por %p122, %p123
    %p125 = scmp.ne.s32.totalorder %s117, %s120
    %p126 = scmp.eq.s32.totalorder %s10, 0
    %p127 = por %p125, %p126
    %p128 = scmp.ne.s32.totalorder %s117, %s120
    %p129 = scmp.eq.s32.totalorder %s15, 3
    %p130 = por %p128, %p129
    %p131 = scmp.ne.s32.totalorder %s120, %s121
    %p132 = scmp.eq.s32.totalorder %s15, 0
    %p133 = por %p131, %p132
    %p134 = scmp.ne.s32.totalorder %s120, %s121
    %p135 = scmp.eq.s32.totalorder %s16, 3
    %p136 = por %p134, %p135
    %p138 = scmp.ne.s32.totalorder %s121, %s137
    %p139 = scmp.eq.s32.totalorder %s16, 0
    %p140 = por %p138, %p139
    %s141 = ssub.s32 %s17, %s36
    %s142 = ssub.s32 %s18, %s32
    %s143 = sor.u32 %s141, %s142
    %s144 = ssub.s32 %s19, %s28
    %s145 = sor.u32 %s143, %s144
    %p146 = scmp.eq.s32.totalorder %s145, 0
    %s148 = sadd.s32 %s147, 1
    %s149 = scalar_select %p146, %s147, %s148
    %p152 = pneg %p146
    %p153 = scmp.eq.s32.totalorder %s10, 3
    %p154 = por %p152, %p153
    %p155 = scmp.ne.s32.totalorder %s147, %s150
    %p156 = scmp.eq.s32.totalorder %s10, 0
    %p157 = por %p155, %p156
    %p158 = scmp.ne.s32.totalorder %s147, %s150
    %p159 = scmp.eq.s32.totalorder %s15, 3
    %p160 = por %p158, %p159
    %p161 = scmp.ne.s32.totalorder %s150, %s151
    %p162 = scmp.eq.s32.totalorder %s15, 0
    %p163 = por %p161, %p162
    %p164 = scmp.ne.s32.totalorder %s150, %s151
    %p165 = scmp.eq.s32.totalorder %s16, 3
    %p166 = por %p164, %p165
    %p168 = scmp.ne.s32.totalorder %s151, %s167
    %p169 = scmp.eq.s32.totalorder %s16, 0
    %p170 = por %p168, %p169
    %p171 = scmp.le.s32.totalorder 1, %s10
    %p172 = scmp.lt.s32.totalorder %s10, 5
    %p173 = pnand %p171, %p172
    %p174 = pneg %p173
    // Predicated region
    $region9: #{repblock_forward.1} parent=5 // pred_check
      _
    $region10: #{repblock_forward.1} parent=5 // pred_check_branch
      %176 = sbr.rel (%p173) target = $region12
    $region11: #{repblock_forward.1} parent=5 // pred_region
      %s177 = ssub.s32 %s10, 1
      // Predicated region
      $region13: #{repblock_forward.1} parent=11 // pred_check
        %p178 = pneg %p81
      $region14: #{repblock_forward.1} parent=11 // pred_check_branch
        %180 = sbr.rel (%p178) target = $region16
      $region15: #{repblock_forward.1} parent=11 // pred_region
        %p181 = scmp.lt.s32.totalorder %s21, 0
        %s182 = scalar_select %p181, %s21, 0
        %s183 = smul.addr %s182, 4
        %s184 = scalar_lea.vmem %s1, %s183
      $region16: #{repblock_forward.1} parent=11 // pred_fallthru
        _
      // Predicated region
      $region17: #{repblock_forward.1} parent=11 // pred_check
        %p185 = pneg %p107
      $region18: #{repblock_forward.1} parent=11 // pred_check_branch
        %187 = sbr.rel (%p185) target = $region20
      $region19: #{repblock_forward.1} parent=11 // pred_region
        %p188 = scmp.lt.s32.totalorder %s21, 0
        %s189 = scalar_select %p188, %s21, 0
        %s190 = smul.addr %s189, 4
        %s191 = scalar_lea.vmem %s2, %s190
      $region20: #{repblock_forward.1} parent=11 // pred_fallthru
        _
      // Predicated region
      $region21: #{repblock_forward.1} parent=11 // pred_check
        %p192 = pneg %p133
      $region22: #{repblock_forward.1} parent=11 // pred_check_branch
        %194 = sbr.rel (%p192) target = $region24
      $region23: #{repblock_forward.1} parent=11 // pred_region
        %p195 = scmp.lt.s32.totalorder %s21, 0
        %s196 = scalar_select %p195, %s21, 0
        %s197 = smul.addr %s196, 4
        %s198 = scalar_lea.vmem %s3, %s197
      $region24: #{repblock_forward.1} parent=11 // pred_fallthru
        _
    $region12: #{repblock_forward.1} parent=5 // pred_fallthru
      _
    %p199 = scmp.lt.s32.totalorder %s10, 4
    // Predicated region
    $region25: #{repblock_forward.1} parent=5 // pred_check
      %p200 = pneg %p199
    $region26: #{repblock_forward.1} parent=5 // pred_check_branch
      %202 = sbr.rel (%p200) target = $region28
    $region27: #{repblock_forward.1} parent=5 // pred_region
      // Predicated region
      $region29: #{repblock_forward.1} parent=27 // pred_check
        %p203 = pneg %p49
      $region30: #{repblock_forward.1} parent=27 // pred_check_branch
        %205 = sbr.rel (%p203) target = $region32
      $region31: #{repblock_forward.1} parent=27 // pred_region
        %p206 = scmp.lt.s32.totalorder %s17, 1
        %s207 = scalar_select %p206, %s17, 1
        %s208 = smul.addr %s207, 12
        %s209 = smul.addr %s208, 8
        %s210 = scalar_lea.vmem %s0, %s209
      $region32: #{repblock_forward.1} parent=27 // pred_fallthru
        _
    $region28: #{repblock_forward.1} parent=5 // pred_fallthru
      _
    %p211 = scmp.le.s32.totalorder 1, %s10
    %p212 = scmp.lt.s32.totalorder %s10, 5
    %p213 = pnand %p211, %p212
    %p214 = pneg %p213
    // Predicated region
    $region33: #{repblock_forward.1} parent=5 // pred_check
      _
    $region34: #{repblock_forward.1} parent=5 // pred_check_branch
      %216 = sbr.rel (%p213) target = $region36
    $region35: #{repblock_forward.1} parent=5 // pred_region
      %s217 = ssub.s32 %s10, 1
      %p218 = scmp.lt.s32.totalorder %s20, 1
      %s219 = scalar_select %p218, %s20, 1
      %s220 = smul.addr %s219, 12
      %s221 = smul.addr %s220, 8
      %s222 = scalar_lea.vmem %s0, %s221
      %p223 = pneg %p55
      %p224 = pneg %p52
      %p225 = scmp.lt.s32.totalorder %s21, 0
      %s226 = scalar_select %p225, %s21, 0
      %s227 = smul.addr %s226, 4
      %s228 = scalar_lea.vmem %s1, %s227
      %p229 = pneg %p81
      %p230 = pneg %p78
      %p231 = scmp.lt.s32.totalorder %s21, 0
      %s232 = scalar_select %p231, %s21, 0
      %s233 = smul.addr %s232, 4
      %s234 = scalar_lea.vmem %s2, %s233
      %p235 = pneg %p107
      %p236 = pneg %p104
      %p237 = scmp.lt.s32.totalorder %s21, 0
      %s238 = scalar_select %p237, %s21, 0
      %s239 = smul.addr %s238, 4
      %s240 = scalar_lea.vmem %s3, %s239
      %p241 = pneg %p133
      %p242 = pneg %p130
      %p243 = pneg %p163
      %p244 = pneg %p160
      %p245 = scmp.lt.s32.totalorder %s20, 1
      %s246 = scalar_select %p245, %s20, 1
      %p247 = scmp.lt.s32.totalorder %s21, 0
      %s248 = scalar_select %p247, %s21, 0
      %p249 = scmp.lt.s32.totalorder %s22, 1
      %s250 = scalar_select %p249, %s22, 1
      %s251 = smul.addr %s248, 2
      %s252 = sadd.s32 %s250, %s251
      %s253 = smul.addr %s246, 2
      %s254 = sadd.s32 %s252, %s253
      %s255 = smul.addr %s254, 4
      %s256 = scalar_lea.vmem %s4, %s255
      %p257 = scmp.lt.s32.totalorder %s20, 1
      %s258 = scalar_select %p257, %s20, 1
      %s259 = smul.addr %s258, 12
      %s260 = smul.addr %s259, 8
      %s261 = scalar_lea.vmem %s0, %s260
      %p262 = scmp.lt.s32.totalorder %s21, 0
      %s263 = scalar_select %p262, %s21, 0
      %s264 = smul.addr %s263, 4
      %s265 = scalar_lea.vmem %s1, %s264
      %p266 = scmp.lt.s32.totalorder %s21, 0
      %s267 = scalar_select %p266, %s21, 0
      %s268 = smul.addr %s267, 4
      %s269 = scalar_lea.vmem %s2, %s268
      %p270 = scmp.lt.s32.totalorder %s21, 0
      %s271 = scalar_select %p270, %s21, 0
      %s272 = smul.addr %s271, 4
      %s273 = scalar_lea.vmem %s3, %s272
      %p274 = scmp.lt.s32.totalorder %s20, 1
      %s275 = scalar_select %p274, %s20, 1
      %p276 = scmp.lt.s32.totalorder %s21, 0
      %s277 = scalar_select %p276, %s21, 0
      %p278 = scmp.lt.s32.totalorder %s22, 1
      %s279 = scalar_select %p278, %s22, 1
      %s280 = smul.addr %s277, 2
      %s281 = sadd.s32 %s279, %s280
      %s282 = smul.addr %s275, 2
      %s283 = sadd.s32 %s281, %s282
      %s284 = smul.addr %s283, 4
      %s285 = scalar_lea.vmem %s4, %s284
      %s286 = smul.u32 %s22, 8
      %s287 = scalar_lea.vmem %s261, %s286
      %v288 = vld [vmem:[%s287] sm:$0xff]
      %vm289 = vcmask 130048
      %290 = vst.msk [vmem:[#allocation2] sm:$0xff] %vm289, %v288
      %292 = vrot.lane.b32.xlu0 %v288, 127
      %v293 = vpop.permute.xlu0 %292
      %s295 = scalar_lea.vmem [#allocation2], 8
      %296 = vst.msk [vmem:[%s295] sm:$0xff] %vm289, %v293
      %297 = vrot.lane.b32.xlu0 %v288, 126
      %v298 = vpop.permute.xlu0 %297
      %s300 = scalar_lea.vmem [#allocation2], 16
      %301 = vst.msk [vmem:[%s300] sm:$0xff] %vm289, %v298
      %s302 = sadd.s32 %s286, 1
      %s303 = scalar_lea.vmem %s261, %s302
      %v304 = vld [vmem:[%s303] sm:$0xff]
      %s305 = scalar_lea.vmem [#allocation2], 24
      %306 = vst.msk [vmem:[%s305] sm:$0xff] %vm289, %v304
      %308 = vrot.lane.b32.xlu0 %v304, 127
      %v309 = vpop.permute.xlu0 %308
      %s311 = scalar_lea.vmem [#allocation2], 32
      %312 = vst.msk [vmem:[%s311] sm:$0xff] %vm289, %v309
      %313 = vrot.lane.b32.xlu0 %v304, 126
      %v314 = vpop.permute.xlu0 %313
      %s316 = scalar_lea.vmem [#allocation2], 40
      %317 = vst.msk [vmem:[%s316] sm:$0xff] %vm289, %v314
      %s318 = sadd.s32 %s286, 2
      %s319 = scalar_lea.vmem %s261, %s318
      %v320 = vld [vmem:[%s319] sm:$0xff]
      %s321 = scalar_lea.vmem [#allocation2], 48
      %322 = vst.msk [vmem:[%s321] sm:$0xff] %vm289, %v320
      %324 = vrot.lane.b32.xlu0 %v320, 127
      %v325 = vpop.permute.xlu0 %324
      %s327 = scalar_lea.vmem [#allocation2], 56
      %328 = vst.msk [vmem:[%s327] sm:$0xff] %vm289, %v325
      %329 = vrot.lane.b32.xlu0 %v320, 126
      %v330 = vpop.permute.xlu0 %329
      %s332 = scalar_lea.vmem [#allocation2], 64
      %333 = vst.msk [vmem:[%s332] sm:$0xff] %vm289, %v330
      %s334 = sadd.s32 %s286, 24
      %s335 = scalar_lea.vmem %s261, %s334
      %v336 = vld [vmem:[%s335] sm:$0xff]
      %s337 = scalar_lea.vmem [#allocation2], 72
      %338 = vst.msk [vmem:[%s337] sm:$0xff] %vm289, %v336
      %340 = vrot.lane.b32.xlu0 %v336, 127
      %v341 = vpop.permute.xlu0 %340
      %s343 = scalar_lea.vmem [#allocation2], 80
      %344 = vst.msk [vmem:[%s343] sm:$0xff] %vm289, %v341
      %345 = vrot.lane.b32.xlu0 %v336, 126
      %v346 = vpop.permute.xlu0 %345
      %s348 = scalar_lea.vmem [#allocation2], 88
      %349 = vst.msk [vmem:[%s348] sm:$0xff] %vm289, %v346
      %s350 = sadd.s32 %s302, 24
      %s351 = scalar_lea.vmem %s261, %s350
      %v352 = vld [vmem:[%s351] sm:$0xff]
      %s353 = scalar_lea.vmem [#allocation2], 96
      %354 = vst.msk [vmem:[%s353] sm:$0xff] %vm289, %v352
      %356 = vrot.lane.b32.xlu0 %v352, 127
      %v357 = vpop.permute.xlu0 %356
      %s359 = scalar_lea.vmem [#allocation2], 104
      %360 = vst.msk [vmem:[%s359] sm:$0xff] %vm289, %v357
      %361 = vrot.lane.b32.xlu0 %v352, 126
      %v362 = vpop.permute.xlu0 %361
      %s364 = scalar_lea.vmem [#allocation2], 112
      %365 = vst.msk [vmem:[%s364] sm:$0xff] %vm289, %v362
      %s366 = sadd.s32 %s318, 24
      %s367 = scalar_lea.vmem %s261, %s366
      %v368 = vld [vmem:[%s367] sm:$0xff]
      %s369 = scalar_lea.vmem [#allocation2], 120
      %370 = vst.msk [vmem:[%s369] sm:$0xff] %vm289, %v368
      %372 = vrot.lane.b32.xlu0 %v368, 127
      %v373 = vpop.permute.xlu0 %372
      %s375 = scalar_lea.vmem [#allocation2], 128
      %376 = vst.msk [vmem:[%s375] sm:$0xff] %vm289, %v373
      %377 = vrot.lane.b32.xlu0 %v368, 126
      %v378 = vpop.permute.xlu0 %377
      %s380 = scalar_lea.vmem [#allocation2], 136
      %381 = vst.msk [vmem:[%s380] sm:$0xff] %vm289, %v378
      %s382 = sadd.s32 %s286, 48
      %s383 = scalar_lea.vmem %s261, %s382
      %v384 = vld [vmem:[%s383] sm:$0xff]
      %s385 = scalar_lea.vmem [#allocation2], 144
      %386 = vst.msk [vmem:[%s385] sm:$0xff] %vm289, %v384
      %388 = vrot.lane.b32.xlu0 %v384, 127
      %v389 = vpop.permute.xlu0 %388
      %s391 = scalar_lea.vmem [#allocation2], 152
      %392 = vst.msk [vmem:[%s391] sm:$0xff] %vm289, %v389
      %393 = vrot.lane.b32.xlu0 %v384, 126
      %v394 = vpop.permute.xlu0 %393
      %s396 = scalar_lea.vmem [#allocation2], 160
      %397 = vst.msk [vmem:[%s396] sm:$0xff] %vm289, %v394
      %s398 = sadd.s32 %s302, 48
      %s399 = scalar_lea.vmem %s261, %s398
      %v400 = vld [vmem:[%s399] sm:$0xff]
      %s401 = scalar_lea.vmem [#allocation2], 168
      %402 = vst.msk [vmem:[%s401] sm:$0xff] %vm289, %v400
      %404 = vrot.lane.b32.xlu0 %v400, 127
      %v405 = vpop.permute.xlu0 %404
      %s407 = scalar_lea.vmem [#allocation2], 176
      %408 = vst.msk [vmem:[%s407] sm:$0xff] %vm289, %v405
      %409 = vrot.lane.b32.xlu0 %v400, 126
      %v410 = vpop.permute.xlu0 %409
      %s412 = scalar_lea.vmem [#allocation2], 184
      %413 = vst.msk [vmem:[%s412] sm:$0xff] %vm289, %v410
      %s414 = sadd.s32 %s318, 48
      %s415 = scalar_lea.vmem %s261, %s414
      %v416 = vld [vmem:[%s415] sm:$0xff]
      %s417 = scalar_lea.vmem [#allocation2], 192
      %418 = vst.msk [vmem:[%s417] sm:$0xff] %vm289, %v416
      %420 = vrot.lane.b32.xlu0 %v416, 127
      %v421 = vpop.permute.xlu0 %420
      %s423 = scalar_lea.vmem [#allocation2], 200
      %424 = vst.msk [vmem:[%s423] sm:$0xff] %vm289, %v421
      %425 = vrot.lane.b32.xlu0 %v416, 126
      %v426 = vpop.permute.xlu0 %425
      %s428 = scalar_lea.vmem [#allocation2], 208
      %429 = vst.msk [vmem:[%s428] sm:$0xff] %vm289, %v426
      %s430 = sadd.s32 %s286, 72
      %s431 = scalar_lea.vmem %s261, %s430
      %v432 = vld [vmem:[%s431] sm:$0xff]
      %s433 = scalar_lea.vmem [#allocation2], 216
      %434 = vst.msk [vmem:[%s433] sm:$0xff] %vm289, %v432
      %436 = vrot.lane.b32.xlu0 %v432, 127
      %v437 = vpop.permute.xlu0 %436
      %s439 = scalar_lea.vmem [#allocation2], 224
      %440 = vst.msk [vmem:[%s439] sm:$0xff] %vm289, %v437
      %441 = vrot.lane.b32.xlu0 %v432, 126
      %v442 = vpop.permute.xlu0 %441
      %s444 = scalar_lea.vmem [#allocation2], 232
      %445 = vst.msk [vmem:[%s444] sm:$0xff] %vm289, %v442
      %s446 = sadd.s32 %s302, 72
      %s447 = scalar_lea.vmem %s261, %s446
      %v448 = vld [vmem:[%s447] sm:$0xff]
      %s449 = scalar_lea.vmem [#allocation2], 240
      %450 = vst.msk [vmem:[%s449] sm:$0xff] %vm289, %v448
      %452 = vrot.lane.b32.xlu0 %v448, 127
      %v453 = vpop.permute.xlu0 %452
      %s455 = scalar_lea.vmem [#allocation2], 248
      %456 = vst.msk [vmem:[%s455] sm:$0xff] %vm289, %v453
      %457 = vrot.lane.b32.xlu0 %v448, 126
      %v458 = vpop.permute.xlu0 %457
      %s460 = scalar_lea.vmem [#allocation2], 256
      %461 = vst.msk [vmem:[%s460] sm:$0xff] %vm289, %v458
      %s462 = sadd.s32 %s318, 72
      %s463 = scalar_lea.vmem %s261, %s462
      %v464 = vld [vmem:[%s463] sm:$0xff]
      %s465 = scalar_lea.vmem [#allocation2], 264
      %466 = vst.msk [vmem:[%s465] sm:$0xff] %vm289, %v464
      %468 = vrot.lane.b32.xlu0 %v464, 127
      %v469 = vpop.permute.xlu0 %468
      %s471 = scalar_lea.vmem [#allocation2], 272
      %472 = vst.msk [vmem:[%s471] sm:$0xff] %vm289, %v469
      %473 = vrot.lane.b32.xlu0 %v464, 126
      %v474 = vpop.permute.xlu0 %473
      %s476 = scalar_lea.vmem [#allocation2], 280
      %477 = vst.msk [vmem:[%s476] sm:$0xff] %vm289, %v474
      %v478 = vld [vmem:[#allocation2] sm:$0xff]
      %v479 = vld [vmem:[#allocation2 + $0x8] sm:$0xff]
      %v480 = vld [vmem:[#allocation2 + $0x10] sm:$0xff]
      %v481 = vld [vmem:[#allocation2 + $0x18] sm:$0xff]
      %v482 = vld [vmem:[#allocation2 + $0x20] sm:$0xff]
      %v483 = vld [vmem:[#allocation2 + $0x28] sm:$0xff]
      %v484 = vld [vmem:[#allocation2 + $0x30] sm:$0xff]
      %v485 = vld [vmem:[#allocation2 + $0x38] sm:$0xff]
      %v486 = vld [vmem:[#allocation2 + $0x40] sm:$0xff]
      %v487 = vld [vmem:[#allocation2 + $0x48] sm:$0xff]
      %v488 = vld [vmem:[#allocation2 + $0x50] sm:$0xff]
      %v489 = vld [vmem:[#allocation2 + $0x58] sm:$0xff]
      %v490 = vld [vmem:[#allocation2 + $0x60] sm:$0xff]
      %v491 = vld [vmem:[#allocation2 + $0x68] sm:$0xff]
      %v492 = vld [vmem:[#allocation2 + $0x70] sm:$0xff]
      %v493 = vld [vmem:[#allocation2 + $0x78] sm:$0xff]
      %v494 = vld [vmem:[#allocation2 + $0x80] sm:$0xff]
      %v495 = vld [vmem:[#allocation2 + $0x88] sm:$0xff]
      %v496 = vld [vmem:[#allocation2 + $0x90] sm:$0xff]
      %v497 = vld [vmem:[#allocation2 + $0x98] sm:$0xff]
      %v498 = vld [vmem:[#allocation2 + $0xa0] sm:$0xff]
      %v499 = vld [vmem:[#allocation2 + $0xa8] sm:$0xff]
      %v500 = vld [vmem:[#allocation2 + $0xb0] sm:$0xff]
      %v501 = vld [vmem:[#allocation2 + $0xb8] sm:$0xff]
      %v502 = vld [vmem:[#allocation2 + $0xc0] sm:$0xff]
      %v503 = vld [vmem:[#allocation2 + $0xc8] sm:$0xff]
      %v504 = vld [vmem:[#allocation2 + $0xd0] sm:$0xff]
      %v505 = vld [vmem:[#allocation2 + $0xd8] sm:$0xff]
      %v506 = vld [vmem:[#allocation2 + $0xe0] sm:$0xff]
      %v507 = vld [vmem:[#allocation2 + $0xe8] sm:$0xff]
      %v508 = vld [vmem:[#allocation2 + $0xf0] sm:$0xff]
      %v509 = vld [vmem:[#allocation2 + $0xf8] sm:$0xff]
      %v510 = vld [vmem:[#allocation2 + $0x100] sm:$0xff]
      %v511 = vld [vmem:[#allocation2 + $0x108] sm:$0xff]
      %v512 = vld [vmem:[#allocation2 + $0x110] sm:$0xff]
      %v513 = vld [vmem:[#allocation2 + $0x118] sm:$0xff]
      %v514 = vcombine.low %v478, %v480
      %v515 = vcombine.high %v478, %v480
      %v517 = vunpack.c.l.s4 1983009808
      %v518 = vunpack.c.0.s8 %v517
      %v519 = vlaneseq
      %v520 = vshrl.u32 %v519, 7
      %v521 = vsub.s32 %v518, %v520
      %v522 = vrot.slane %v514, %v521
      %v524 = vunpack.c.l.s4 1983009808
      %v525 = vunpack.c.0.s8 %v524
      %v526 = vlaneseq
      %v527 = vshrl.u32 %v526, 7
      %v528 = vsub.s32 %v525, %v527
      %v529 = vrot.slane %v515, %v528
      %v530 = vcombine.low %v479, %v481
      %v531 = vcombine.high %v479, %v481
      %v533 = vunpack.c.l.s4 1983009808
      %v534 = vunpack.c.0.s8 %v533
      %v535 = vlaneseq
      %v536 = vshrl.u32 %v535, 7
      %v537 = vsub.s32 %v534, %v536
      %v538 = vrot.slane %v530, %v537
      %v540 = vunpack.c.l.s4 1983009808
      %v541 = vunpack.c.0.s8 %v540
      %v542 = vlaneseq
      %v543 = vshrl.u32 %v542, 7
      %v544 = vsub.s32 %v541, %v543
      %v545 = vrot.slane %v531, %v544
      %v546 = vcombine.low %v482, %v484
      %v547 = vcombine.high %v482, %v484
      %v549 = vunpack.c.l.s4 1983009808
      %v550 = vunpack.c.0.s8 %v549
      %v551 = vlaneseq
      %v552 = vshrl.u32 %v551, 7
      %v553 = vsub.s32 %v550, %v552
      %v554 = vrot.slane %v546, %v553
      %v556 = vunpack.c.l.s4 1983009808
      %v557 = vunpack.c.0.s8 %v556
      %v558 = vlaneseq
      %v559 = vshrl.u32 %v558, 7
      %v560 = vsub.s32 %v557, %v559
      %v561 = vrot.slane %v547, %v560
      %v562 = vcombine.low %v483, %v485
      %v563 = vcombine.high %v483, %v485
      %v565 = vunpack.c.l.s4 1983009808
      %v566 = vunpack.c.0.s8 %v565
      %v567 = vlaneseq
      %v568 = vshrl.u32 %v567, 7
      %v569 = vsub.s32 %v566, %v568
      %v570 = vrot.slane %v562, %v569
      %v572 = vunpack.c.l.s4 1983009808
      %v573 = vunpack.c.0.s8 %v572
      %v574 = vlaneseq
      %v575 = vshrl.u32 %v574, 7
      %v576 = vsub.s32 %v573, %v575
      %v577 = vrot.slane %v563, %v576
      %v578 = vcombine.low %v522, %v538
      %v579 = vcombine.high %v522, %v538
      %v581 = vunpack.c.l.s4 1934713408
      %v582 = vunpack.c.0.s8 %v581
      %v583 = vlaneseq
      %v584 = vshrl.u32 %v583, 7
      %v585 = vsub.s32 %v582, %v584
      %v586 = vrot.slane %v578, %v585
      %v588 = vunpack.c.l.s4 1934713408
      %v589 = vunpack.c.0.s8 %v588
      %v590 = vlaneseq
      %v591 = vshrl.u32 %v590, 7
      %v592 = vsub.s32 %v589, %v591
      %v593 = vrot.slane %v579, %v592
      %v594 = vcombine.low %v529, %v545
      %v595 = vcombine.high %v529, %v545
      %v597 = vunpack.c.l.s4 1934713408
      %v598 = vunpack.c.0.s8 %v597
      %v599 = vlaneseq
      %v600 = vshrl.u32 %v599, 7
      %v601 = vsub.s32 %v598, %v600
      %v602 = vrot.slane %v594, %v601
      %v604 = vunpack.c.l.s4 1934713408
      %v605 = vunpack.c.0.s8 %v604
      %v606 = vlaneseq
      %v607 = vshrl.u32 %v606, 7
      %v608 = vsub.s32 %v605, %v607
      %v609 = vrot.slane %v595, %v608
      %v610 = vcombine.low %v554, %v570
      %v611 = vcombine.high %v554, %v570
      %v613 = vunpack.c.l.s4 1934713408
      %v614 = vunpack.c.0.s8 %v613
      %v615 = vlaneseq
      %v616 = vshrl.u32 %v615, 7
      %v617 = vsub.s32 %v614, %v616
      %v618 = vrot.slane %v610, %v617
      %v620 = vunpack.c.l.s4 1934713408
      %v621 = vunpack.c.0.s8 %v620
      %v622 = vlaneseq
      %v623 = vshrl.u32 %v622, 7
      %v624 = vsub.s32 %v621, %v623
      %v625 = vrot.slane %v611, %v624
      %v626 = vcombine.low %v561, %v577
      %v627 = vcombine.high %v561, %v577
      %v629 = vunpack.c.l.s4 1934713408
      %v630 = vunpack.c.0.s8 %v629
      %v631 = vlaneseq
      %v632 = vshrl.u32 %v631, 7
      %v633 = vsub.s32 %v630, %v632
      %v634 = vrot.slane %v626, %v633
      %v636 = vunpack.c.l.s4 1934713408
      %v637 = vunpack.c.0.s8 %v636
      %v638 = vlaneseq
      %v639 = vshrl.u32 %v638, 7
      %v640 = vsub.s32 %v637, %v639
      %v641 = vrot.slane %v627, %v640
      %v642 = vcombine.low %v586, %v618
      %v643 = vcombine.high %v586, %v618
      %v644 = vcombine.low %v593, %v625
      %v645 = vcombine.high %v593, %v625
      %v646 = vcombine.low %v602, %v634
      %v647 = vcombine.high %v602, %v634
      %v648 = vcombine.low %v609, %v641
      %v649 = vcombine.high %v609, %v641
      %v650 = vcombine.low %v486, %v488
      %v651 = vcombine.high %v486, %v488
      %v653 = vunpack.c.l.s4 1983009808
      %v654 = vunpack.c.0.s8 %v653
      %v655 = vlaneseq
      %v656 = vshrl.u32 %v655, 7
      %v657 = vsub.s32 %v654, %v656
      %v658 = vrot.slane %v650, %v657
      %v660 = vunpack.c.l.s4 1983009808
      %v661 = vunpack.c.0.s8 %v660
      %v662 = vlaneseq
      %v663 = vshrl.u32 %v662, 7
      %v664 = vsub.s32 %v661, %v663
      %v665 = vrot.slane %v651, %v664
      %v666 = vcombine.low %v487, %v489
      %v667 = vcombine.high %v487, %v489
      %v669 = vunpack.c.l.s4 1983009808
      %v670 = vunpack.c.0.s8 %v669
      %v671 = vlaneseq
      %v672 = vshrl.u32 %v671, 7
      %v673 = vsub.s32 %v670, %v672
      %v674 = vrot.slane %v666, %v673
      %v676 = vunpack.c.l.s4 1983009808
      %v677 = vunpack.c.0.s8 %v676
      %v678 = vlaneseq
      %v679 = vshrl.u32 %v678, 7
      %v680 = vsub.s32 %v677, %v679
      %v681 = vrot.slane %v667, %v680
      %v682 = vcombine.low %v490, %v492
      %v683 = vcombine.high %v490, %v492
      %v685 = vunpack.c.l.s4 1983009808
      %v686 = vunpack.c.0.s8 %v685
      %v687 = vlaneseq
      %v688 = vshrl.u32 %v687, 7
      %v689 = vsub.s32 %v686, %v688
      %v690 = vrot.slane %v682, %v689
      %v692 = vunpack.c.l.s4 1983009808
      %v693 = vunpack.c.0.s8 %v692
      %v694 = vlaneseq
      %v695 = vshrl.u32 %v694, 7
      %v696 = vsub.s32 %v693, %v695
      %v697 = vrot.slane %v683, %v696
      %v698 = vcombine.low %v491, %v493
      %v699 = vcombine.high %v491, %v493
      %v701 = vunpack.c.l.s4 1983009808
      %v702 = vunpack.c.0.s8 %v701
      %v703 = vlaneseq
      %v704 = vshrl.u32 %v703, 7
      %v705 = vsub.s32 %v702, %v704
      %v706 = vrot.slane %v698, %v705
      %v708 = vunpack.c.l.s4 1983009808
      %v709 = vunpack.c.0.s8 %v708
      %v710 = vlaneseq
      %v711 = vshrl.u32 %v710, 7
      %v712 = vsub.s32 %v709, %v711
      %v713 = vrot.slane %v699, %v712
      %v714 = vcombine.low %v658, %v674
      %v715 = vcombine.high %v658, %v674
      %v717 = vunpack.c.l.s4 1934713408
      %v718 = vunpack.c.0.s8 %v717
      %v719 = vlaneseq
      %v720 = vshrl.u32 %v719, 7
      %v721 = vsub.s32 %v718, %v720
      %v722 = vrot.slane %v714, %v721
      %v724 = vunpack.c.l.s4 1934713408
      %v725 = vunpack.c.0.s8 %v724
      %v726 = vlaneseq
      %v727 = vshrl.u32 %v726, 7
      %v728 = vsub.s32 %v725, %v727
      %v729 = vrot.slane %v715, %v728
      %v730 = vcombine.low %v665, %v681
      %v731 = vcombine.high %v665, %v681
      %v733 = vunpack.c.l.s4 1934713408
      %v734 = vunpack.c.0.s8 %v733
      %v735 = vlaneseq
      %v736 = vshrl.u32 %v735, 7
      %v737 = vsub.s32 %v734, %v736
      %v738 = vrot.slane %v730, %v737
      %v740 = vunpack.c.l.s4 1934713408
      %v741 = vunpack.c.0.s8 %v740
      %v742 = vlaneseq
      %v743 = vshrl.u32 %v742, 7
      %v744 = vsub.s32 %v741, %v743
      %v745 = vrot.slane %v731, %v744
      %v746 = vcombine.low %v690, %v706
      %v747 = vcombine.high %v690, %v706
      %v749 = vunpack.c.l.s4 1934713408
      %v750 = vunpack.c.0.s8 %v749
      %v751 = vlaneseq
      %v752 = vshrl.u32 %v751, 7
      %v753 = vsub.s32 %v750, %v752
      %v754 = vrot.slane %v746, %v753
      %v756 = vunpack.c.l.s4 1934713408
      %v757 = vunpack.c.0.s8 %v756
      %v758 = vlaneseq
      %v759 = vshrl.u32 %v758, 7
      %v760 = vsub.s32 %v757, %v759
      %v761 = vrot.slane %v747, %v760
      %v762 = vcombine.low %v697, %v713
      %v763 = vcombine.high %v697, %v713
      %v765 = vunpack.c.l.s4 1934713408
      %v766 = vunpack.c.0.s8 %v765
      %v767 = vlaneseq
      %v768 = vshrl.u32 %v767, 7
      %v769 = vsub.s32 %v766, %v768
      %v770 = vrot.slane %v762, %v769
      %v772 = vunpack.c.l.s4 1934713408
      %v773 = vunpack.c.0.s8 %v772
      %v774 = vlaneseq
      %v775 = vshrl.u32 %v774, 7
      %v776 = vsub.s32 %v773, %v775
      %v777 = vrot.slane %v763, %v776
      %v778 = vcombine.low %v722, %v754
      %v779 = vcombine.high %v722, %v754
      %v780 = vcombine.low %v729, %v761
      %v781 = vcombine.high %v729, %v761
      %v782 = vcombine.low %v738, %v770
      %v783 = vcombine.high %v738, %v770
      %v784 = vcombine.low %v745, %v777
      %v785 = vcombine.high %v745, %v777
      %v786 = vcombine.low %v494, %v496
      %v787 = vcombine.high %v494, %v496
      %v789 = vunpack.c.l.s4 1983009808
      %v790 = vunpack.c.0.s8 %v789
      %v791 = vlaneseq
      %v792 = vshrl.u32 %v791, 7
      %v793 = vsub.s32 %v790, %v792
      %v794 = vrot.slane %v786, %v793
      %v796 = vunpack.c.l.s4 1983009808
      %v797 = vunpack.c.0.s8 %v796
      %v798 = vlaneseq
      %v799 = vshrl.u32 %v798, 7
      %v800 = vsub.s32 %v797, %v799
      %v801 = vrot.slane %v787, %v800
      %v802 = vcombine.low %v495, %v497
      %v803 = vcombine.high %v495, %v497
      %v805 = vunpack.c.l.s4 1983009808
      %v806 = vunpack.c.0.s8 %v805
      %v807 = vlaneseq
      %v808 = vshrl.u32 %v807, 7
      %v809 = vsub.s32 %v806, %v808
      %v810 = vrot.slane %v802, %v809
      %v812 = vunpack.c.l.s4 1983009808
      %v813 = vunpack.c.0.s8 %v812
      %v814 = vlaneseq
      %v815 = vshrl.u32 %v814, 7
      %v816 = vsub.s32 %v813, %v815
      %v817 = vrot.slane %v803, %v816
      %v818 = vcombine.low %v498, %v500
      %v819 = vcombine.high %v498, %v500
      %v821 = vunpack.c.l.s4 1983009808
      %v822 = vunpack.c.0.s8 %v821
      %v823 = vlaneseq
      %v824 = vshrl.u32 %v823, 7
      %v825 = vsub.s32 %v822, %v824
      %v826 = vrot.slane %v818, %v825
      %v828 = vunpack.c.l.s4 1983009808
      %v829 = vunpack.c.0.s8 %v828
      %v830 = vlaneseq
      %v831 = vshrl.u32 %v830, 7
      %v832 = vsub.s32 %v829, %v831
      %v833 = vrot.slane %v819, %v832
      %v834 = vcombine.low %v499, %v501
      %v835 = vcombine.high %v499, %v501
      %v837 = vunpack.c.l.s4 1983009808
      %v838 = vunpack.c.0.s8 %v837
      %v839 = vlaneseq
      %v840 = vshrl.u32 %v839, 7
      %v841 = vsub.s32 %v838, %v840
      %v842 = vrot.slane %v834, %v841
      %v844 = vunpack.c.l.s4 1983009808
      %v845 = vunpack.c.0.s8 %v844
      %v846 = vlaneseq
      %v847 = vshrl.u32 %v846, 7
      %v848 = vsub.s32 %v845, %v847
      %v849 = vrot.slane %v835, %v848
      %v850 = vcombine.low %v794, %v810
      %v851 = vcombine.high %v794, %v810
      %v853 = vunpack.c.l.s4 1934713408
      %v854 = vunpack.c.0.s8 %v853
      %v855 = vlaneseq
      %v856 = vshrl.u32 %v855, 7
      %v857 = vsub.s32 %v854, %v856
      %v858 = vrot.slane %v850, %v857
      %v860 = vunpack.c.l.s4 1934713408
      %v861 = vunpack.c.0.s8 %v860
      %v862 = vlaneseq
      %v863 = vshrl.u32 %v862, 7
      %v864 = vsub.s32 %v861, %v863
      %v865 = vrot.slane %v851, %v864
      %v866 = vcombine.low %v801, %v817
      %v867 = vcombine.high %v801, %v817
      %v869 = vunpack.c.l.s4 1934713408
      %v870 = vunpack.c.0.s8 %v869
      %v871 = vlaneseq
      %v872 = vshrl.u32 %v871, 7
      %v873 = vsub.s32 %v870, %v872
      %v874 = vrot.slane %v866, %v873
      %v876 = vunpack.c.l.s4 1934713408
      %v877 = vunpack.c.0.s8 %v876
      %v878 = vlaneseq
      %v879 = vshrl.u32 %v878, 7
      %v880 = vsub.s32 %v877, %v879
      %v881 = vrot.slane %v867, %v880
      %v882 = vcombine.low %v826, %v842
      %v883 = vcombine.high %v826, %v842
      %v885 = vunpack.c.l.s4 1934713408
      %v886 = vunpack.c.0.s8 %v885
      %v887 = vlaneseq
      %v888 = vshrl.u32 %v887, 7
      %v889 = vsub.s32 %v886, %v888
      %v890 = vrot.slane %v882, %v889
      %v892 = vunpack.c.l.s4 1934713408
      %v893 = vunpack.c.0.s8 %v892
      %v894 = vlaneseq
      %v895 = vshrl.u32 %v894, 7
      %v896 = vsub.s32 %v893, %v895
      %v897 = vrot.slane %v883, %v896
      %v898 = vcombine.low %v833, %v849
      %v899 = vcombine.high %v833, %v849
      %v901 = vunpack.c.l.s4 1934713408
      %v902 = vunpack.c.0.s8 %v901
      %v903 = vlaneseq
      %v904 = vshrl.u32 %v903, 7
      %v905 = vsub.s32 %v902, %v904
      %v906 = vrot.slane %v898, %v905
      %v908 = vunpack.c.l.s4 1934713408
      %v909 = vunpack.c.0.s8 %v908
      %v910 = vlaneseq
      %v911 = vshrl.u32 %v910, 7
      %v912 = vsub.s32 %v909, %v911
      %v913 = vrot.slane %v899, %v912
      %v914 = vcombine.low %v858, %v890
      %v915 = vcombine.high %v858, %v890
      %v916 = vcombine.low %v865, %v897
      %v917 = vcombine.high %v865, %v897
      %v918 = vcombine.low %v874, %v906
      %v919 = vcombine.high %v874, %v906
      %v920 = vcombine.low %v881, %v913
      %v921 = vcombine.high %v881, %v913
      %v922 = vcombine.low %v502, %v504
      %v923 = vcombine.high %v502, %v504
      %v925 = vunpack.c.l.s4 1983009808
      %v926 = vunpack.c.0.s8 %v925
      %v927 = vlaneseq
      %v928 = vshrl.u32 %v927, 7
      %v929 = vsub.s32 %v926, %v928
      %v930 = vrot.slane %v922, %v929
      %v932 = vunpack.c.l.s4 1983009808
      %v933 = vunpack.c.0.s8 %v932
      %v934 = vlaneseq
      %v935 = vshrl.u32 %v934, 7
      %v936 = vsub.s32 %v933, %v935
      %v937 = vrot.slane %v923, %v936
      %v938 = vcombine.low %v503, %v505
      %v939 = vcombine.high %v503, %v505
      %v941 = vunpack.c.l.s4 1983009808
      %v942 = vunpack.c.0.s8 %v941
      %v943 = vlaneseq
      %v944 = vshrl.u32 %v943, 7
      %v945 = vsub.s32 %v942, %v944
      %v946 = vrot.slane %v938, %v945
      %v948 = vunpack.c.l.s4 1983009808
      %v949 = vunpack.c.0.s8 %v948
      %v950 = vlaneseq
      %v951 = vshrl.u32 %v950, 7
      %v952 = vsub.s32 %v949, %v951
      %v953 = vrot.slane %v939, %v952
      %v954 = vcombine.low %v506, %v508
      %v955 = vcombine.high %v506, %v508
      %v957 = vunpack.c.l.s4 1983009808
      %v958 = vunpack.c.0.s8 %v957
      %v959 = vlaneseq
      %v960 = vshrl.u32 %v959, 7
      %v961 = vsub.s32 %v958, %v960
      %v962 = vrot.slane %v954, %v961
      %v964 = vunpack.c.l.s4 1983009808
      %v965 = vunpack.c.0.s8 %v964
      %v966 = vlaneseq
      %v967 = vshrl.u32 %v966, 7
      %v968 = vsub.s32 %v965, %v967
      %v969 = vrot.slane %v955, %v968
      %v970 = vcombine.low %v507, %v509
      %v971 = vcombine.high %v507, %v509
      %v973 = vunpack.c.l.s4 1983009808
      %v974 = vunpack.c.0.s8 %v973
      %v975 = vlaneseq
      %v976 = vshrl.u32 %v975, 7
      %v977 = vsub.s32 %v974, %v976
      %v978 = vrot.slane %v970, %v977
      %v980 = vunpack.c.l.s4 1983009808
      %v981 = vunpack.c.0.s8 %v980
      %v982 = vlaneseq
      %v983 = vshrl.u32 %v982, 7
      %v984 = vsub.s32 %v981, %v983
      %v985 = vrot.slane %v971, %v984
      %v986 = vcombine.low %v930, %v946
      %v987 = vcombine.high %v930, %v946
      %v989 = vunpack.c.l.s4 1934713408
      %v990 = vunpack.c.0.s8 %v989
      %v991 = vlaneseq
      %v992 = vshrl.u32 %v991, 7
      %v993 = vsub.s32 %v990, %v992
      %v994 = vrot.slane %v986, %v993
      %v996 = vunpack.c.l.s4 1934713408
      %v997 = vunpack.c.0.s8 %v996
      %v998 = vlaneseq
      %v999 = vshrl.u32 %v998, 7
      %v1000 = vsub.s32 %v997, %v999
      %v1001 = vrot.slane %v987, %v1000
      %v1002 = vcombine.low %v937, %v953
      %v1003 = vcombine.high %v937, %v953
      %v1005 = vunpack.c.l.s4 1934713408
      %v1006 = vunpack.c.0.s8 %v1005
      %v1007 = vlaneseq
      %v1008 = vshrl.u32 %v1007, 7
      %v1009 = vsub.s32 %v1006, %v1008
      %v1010 = vrot.slane %v1002, %v1009
      %v1012 = vunpack.c.l.s4 1934713408
      %v1013 = vunpack.c.0.s8 %v1012
      %v1014 = vlaneseq
      %v1015 = vshrl.u32 %v1014, 7
      %v1016 = vsub.s32 %v1013, %v1015
      %v1017 = vrot.slane %v1003, %v1016
      %v1018 = vcombine.low %v962, %v978
      %v1019 = vcombine.high %v962, %v978
      %v1021 = vunpack.c.l.s4 1934713408
      %v1022 = vunpack.c.0.s8 %v1021
      %v1023 = vlaneseq
      %v1024 = vshrl.u32 %v1023, 7
      %v1025 = vsub.s32 %v1022, %v1024
      %v1026 = vrot.slane %v1018, %v1025
      %v1028 = vunpack.c.l.s4 1934713408
      %v1029 = vunpack.c.0.s8 %v1028
      %v1030 = vlaneseq
      %v1031 = vshrl.u32 %v1030, 7
      %v1032 = vsub.s32 %v1029, %v1031
      %v1033 = vrot.slane %v1019, %v1032
      %v1034 = vcombine.low %v969, %v985
      %v1035 = vcombine.high %v969, %v985
      %v1037 = vunpack.c.l.s4 1934713408
      %v1038 = vunpack.c.0.s8 %v1037
      %v1039 = vlaneseq
      %v1040 = vshrl.u32 %v1039, 7
      %v1041 = vsub.s32 %v1038, %v1040
      %v1042 = vrot.slane %v1034, %v1041
      %v1044 = vunpack.c.l.s4 1934713408
      %v1045 = vunpack.c.0.s8 %v1044
      %v1046 = vlaneseq
      %v1047 = vshrl.u32 %v1046, 7
      %v1048 = vsub.s32 %v1045, %v1047
      %v1049 = vrot.slane %v1035, %v1048
      %v1050 = vcombine.low %v994, %v1026
      %v1051 = vcombine.high %v994, %v1026
      %v1052 = vcombine.low %v1001, %v1033
      %v1053 = vcombine.high %v1001, %v1033
      %v1054 = vcombine.low %v1010, %v1042
      %v1055 = vcombine.high %v1010, %v1042
      %v1056 = vcombine.low %v1017, %v1049
      %v1057 = vcombine.high %v1017, %v1049
      %v1058 = vcombine.low %v510, %v512
      %v1059 = vcombine.high %v510, %v512
      %v1061 = vunpack.c.l.s4 1983009808
      %v1062 = vunpack.c.0.s8 %v1061
      %v1063 = vlaneseq
      %v1064 = vshrl.u32 %v1063, 7
      %v1065 = vsub.s32 %v1062, %v1064
      %v1066 = vrot.slane %v1058, %v1065
      %v1068 = vunpack.c.l.s4 1983009808
      %v1069 = vunpack.c.0.s8 %v1068
      %v1070 = vlaneseq
      %v1071 = vshrl.u32 %v1070, 7
      %v1072 = vsub.s32 %v1069, %v1071
      %v1073 = vrot.slane %v1059, %v1072
      %v1074 = vcombine.low %v511, %v513
      %v1075 = vcombine.high %v511, %v513
      %v1077 = vunpack.c.l.s4 1983009808
      %v1078 = vunpack.c.0.s8 %v1077
      %v1079 = vlaneseq
      %v1080 = vshrl.u32 %v1079, 7
      %v1081 = vsub.s32 %v1078, %v1080
      %v1082 = vrot.slane %v1074, %v1081
      %v1084 = vunpack.c.l.s4 1983009808
      %v1085 = vunpack.c.0.s8 %v1084
      %v1086 = vlaneseq
      %v1087 = vshrl.u32 %v1086, 7
      %v1088 = vsub.s32 %v1085, %v1087
      %v1089 = vrot.slane %v1075, %v1088
      %v1090 = vcombine.low %v1066, %v1082
      %v1091 = vcombine.high %v1066, %v1082
      %v1093 = vunpack.c.l.s4 1934713408
      %v1094 = vunpack.c.0.s8 %v1093
      %v1095 = vlaneseq
      %v1096 = vshrl.u32 %v1095, 7
      %v1097 = vsub.s32 %v1094, %v1096
      %v1098 = vrot.slane %v1090, %v1097
      %v1100 = vunpack.c.l.s4 1934713408
      %v1101 = vunpack.c.0.s8 %v1100
      %v1102 = vlaneseq
      %v1103 = vshrl.u32 %v1102, 7
      %v1104 = vsub.s32 %v1101, %v1103
      %v1105 = vrot.slane %v1091, %v1104
      %v1106 = vcombine.low %v1073, %v1089
      %v1107 = vcombine.high %v1073, %v1089
      %v1109 = vunpack.c.l.s4 1934713408
      %v1110 = vunpack.c.0.s8 %v1109
      %v1111 = vlaneseq
      %v1112 = vshrl.u32 %v1111, 7
      %v1113 = vsub.s32 %v1110, %v1112
      %v1114 = vrot.slane %v1106, %v1113
      %v1116 = vunpack.c.l.s4 1934713408
      %v1117 = vunpack.c.0.s8 %v1116
      %v1118 = vlaneseq
      %v1119 = vshrl.u32 %v1118, 7
      %v1120 = vsub.s32 %v1117, %v1119
      %v1121 = vrot.slane %v1107, %v1120
      %v1122 = vcombine.high %v1098, 0.0
      %v1123 = vcombine.high %v1105, 0.0
      %v1124 = vcombine.high %v1114, 0.0
      %v1125 = vcombine.high %v1121, 0.0
      %1131 = vrot.lane.b32.xlu0 %v643, 16
      %v1132 = vpop.permute.xlu0 %1131
      %1133 = vrot.lane.b32.xlu0 %v779, 16
      %v1134 = vpop.permute.xlu0 %1133
      %1135 = vrot.lane.b32.xlu0 %v915, 16
      %v1136 = vpop.permute.xlu0 %1135
      %1137 = vrot.lane.b32.xlu0 %v1051, 16
      %v1138 = vpop.permute.xlu0 %1137
      %1139 = vrot.lane.b32.xlu0 %v1122, 16
      %v1140 = vpop.permute.xlu0 %1139
      %1151 = vrot.lane.b32.xlu0 %v644, 32
      %v1152 = vpop.permute.xlu0 %1151
      %1153 = vrot.lane.b32.xlu0 %v780, 32
      %v1154 = vpop.permute.xlu0 %1153
      %1155 = vrot.lane.b32.xlu0 %v916, 32
      %v1156 = vpop.permute.xlu0 %1155
      %1157 = vrot.lane.b32.xlu0 %v1052, 32
      %v1158 = vpop.permute.xlu0 %1157
      %1159 = vrot.lane.b32.xlu0 %v1105, 32
      %v1160 = vpop.permute.xlu0 %1159
      %1171 = vrot.lane.b32.xlu0 %v645, 48
      %v1172 = vpop.permute.xlu0 %1171
      %1173 = vrot.lane.b32.xlu0 %v781, 48
      %v1174 = vpop.permute.xlu0 %1173
      %1175 = vrot.lane.b32.xlu0 %v917, 48
      %v1176 = vpop.permute.xlu0 %1175
      %1177 = vrot.lane.b32.xlu0 %v1053, 48
      %v1178 = vpop.permute.xlu0 %1177
      %1179 = vrot.lane.b32.xlu0 %v1123, 48
      %v1180 = vpop.permute.xlu0 %1179
      %1191 = vrot.lane.b32.xlu0 %v646, 64
      %v1192 = vpop.permute.xlu0 %1191
      %1193 = vrot.lane.b32.xlu0 %v782, 64
      %v1194 = vpop.permute.xlu0 %1193
      %1195 = vrot.lane.b32.xlu0 %v918, 64
      %v1196 = vpop.permute.xlu0 %1195
      %1197 = vrot.lane.b32.xlu0 %v1054, 64
      %v1198 = vpop.permute.xlu0 %1197
      %1199 = vrot.lane.b32.xlu0 %v1114, 64
      %v1200 = vpop.permute.xlu0 %1199
      %1211 = vrot.lane.b32.xlu0 %v647, 80
      %v1212 = vpop.permute.xlu0 %1211
      %1213 = vrot.lane.b32.xlu0 %v783, 80
      %v1214 = vpop.permute.xlu0 %1213
      %1215 = vrot.lane.b32.xlu0 %v919, 80
      %v1216 = vpop.permute.xlu0 %1215
      %1217 = vrot.lane.b32.xlu0 %v1055, 80
      %v1218 = vpop.permute.xlu0 %1217
      %1219 = vrot.lane.b32.xlu0 %v1124, 80
      %v1220 = vpop.permute.xlu0 %1219
      %1231 = vrot.lane.b32.xlu0 %v648, 96
      %v1232 = vpop.permute.xlu0 %1231
      %1233 = vrot.lane.b32.xlu0 %v784, 96
      %v1234 = vpop.permute.xlu0 %1233
      %1235 = vrot.lane.b32.xlu0 %v920, 96
      %v1236 = vpop.permute.xlu0 %1235
      %1237 = vrot.lane.b32.xlu0 %v1056, 96
      %v1238 = vpop.permute.xlu0 %1237
      %1239 = vrot.lane.b32.xlu0 %v1121, 96
      %v1240 = vpop.permute.xlu0 %1239
      %1251 = vrot.lane.b32.xlu0 %v649, 112
      %v1252 = vpop.permute.xlu0 %1251
      %1253 = vrot.lane.b32.xlu0 %v785, 112
      %v1254 = vpop.permute.xlu0 %1253
      %1255 = vrot.lane.b32.xlu0 %v921, 112
      %v1256 = vpop.permute.xlu0 %1255
      %1257 = vrot.lane.b32.xlu0 %v1057, 112
      %v1258 = vpop.permute.xlu0 %1257
      %1259 = vrot.lane.b32.xlu0 %v1125, 112
      %v1260 = vpop.permute.xlu0 %1259
      %v1266 = vsel %vm289, %v642, %v1132
      %v1267 = vsel %vm289, %v778, %v1134
      %v1268 = vsel %vm289, %v914, %v1136
      %v1269 = vsel %vm289, %v1050, %v1138
      %v1270 = vsel %vm289, %v1098, %v1140
      %vm1271 = vcmask 261120
      %v1272 = vsel %vm1271, %v1266, %v1152
      %v1273 = vsel %vm1271, %v1267, %v1154
      %v1274 = vsel %vm1271, %v1268, %v1156
      %v1275 = vsel %vm1271, %v1269, %v1158
      %v1276 = vsel %vm1271, %v1270, %v1160
      %vm1277 = vcmask 392192
      %v1278 = vsel %vm1277, %v1272, %v1172
      %v1279 = vsel %vm1277, %v1273, %v1174
      %v1280 = vsel %vm1277, %v1274, %v1176
      %v1281 = vsel %vm1277, %v1275, %v1178
      %v1282 = vsel %vm1277, %v1276, %v1180
      %vm1283 = vcmask 523264
      %v1284 = vsel %vm1283, %v1278, %v1192
      %v1285 = vsel %vm1283, %v1279, %v1194
      %v1286 = vsel %vm1283, %v1280, %v1196
      %v1287 = vsel %vm1283, %v1281, %v1198
      %v1288 = vsel %vm1283, %v1282, %v1200
      %vm1289 = vcmask 654336
      %v1290 = vsel %vm1289, %v1284, %v1212
      %v1291 = vsel %vm1289, %v1285, %v1214
      %v1292 = vsel %vm1289, %v1286, %v1216
      %v1293 = vsel %vm1289, %v1287, %v1218
      %v1294 = vsel %vm1289, %v1288, %v1220
      %vm1295 = vcmask 785408
      %v1296 = vsel %vm1295, %v1290, %v1232
      %v1297 = vsel %vm1295, %v1291, %v1234
      %v1298 = vsel %vm1295, %v1292, %v1236
      %v1299 = vsel %vm1295, %v1293, %v1238
      %v1300 = vsel %vm1295, %v1294, %v1240
      %vm1301 = vcmask 916480
      %v1302 = vsel %vm1301, %v1296, %v1252
      %v1303 = vsel %vm1301, %v1297, %v1254
      %v1304 = vsel %vm1301, %v1298, %v1256
      %v1305 = vsel %vm1301, %v1299, %v1258
      %v1306 = vsel %vm1301, %v1300, %v1260
      %v1307 = vld [vmem:[%s265] sm:$0xf]
      %v1308 = vld [vmem:[%s269] sm:$0xf]
      %1310 = vset.pattern.permute.xlu0 0
      %1311 = vperm.xlu0 %1310, %v1308
      %v1312 = vpop.permute.xlu0 %1311
      %vm1314 = vcmask 293888
      %v1316 = vsel %vm1314, %v1307, 0
      %vm1318 = vcmask 1043456
      %v1320 = vsel %vm1318, %v1306, 0
      %1322 = vmatprep.subr.mxu0 0.0
      %1323 = vmatpush1.msra.mxu0 0.0
      %1324 = vmatprep.subr.mxu0 0.0
      %1325 = vmatpush1.msra.mxu0 0.0
      %1326 = vmatprep.subr.mxu0 0.0
      %1327 = vmatpush1.msra.mxu0 0.0
      %1328 = vmatprep.subr.mxu0 0.0
      %1329 = vmatpush1.msra.mxu0 0.0
      %1330 = vmatprep.subr.mxu0 0.0
      %1331 = vmatpush1.msra.mxu0 0.0
      %1332 = vmatprep.subr.mxu0 0.0
      %1333 = vmatpush1.msra.mxu0 0.0
      %1334 = vmatprep.subr.mxu0 0.0
      %1335 = vmatpush1.msra.mxu0 0.0
      %1336 = vmatprep.subr.mxu0 0.0
      %1337 = vmatpush1.msra.mxu0 0.0
      %1338 = vmatprep.subr.mxu0 0.0
      %1339 = vmatpush1.msra.mxu0 0.0
      %1340 = vmatprep.subr.mxu0 0.0
      %1341 = vmatpush1.msra.mxu0 0.0
      %1342 = vmatprep.subr.mxu0 0.0
      %1343 = vmatpush1.msra.mxu0 0.0
      %1344 = vmatprep.subr.mxu0 0.0
      %1345 = vmatpush1.msra.mxu0 %v1320
      %1346 = vmatprep.subr.mxu0 0.0
      %1347 = vmatpush1.msra.mxu0 %v1305
      %1348 = vmatprep.subr.mxu0 0.0
      %1349 = vmatpush1.msra.mxu0 %v1304
      %1350 = vmatprep.subr.mxu0 0.0
      %1351 = vmatpush1.msra.mxu0 %v1303
      %1352 = vmatprep.subr.mxu0 0.0
      %1353 = vmatpush1.msra.mxu0 %v1302
      %1354 = vmatprep.subr.mxu0 0.0
      %1355 = vmatpush2.msra.mxu0 0.0
      %1356 = vmatprep.subr.mxu0 0.0
      %1357 = vmatpush2.msra.mxu0 0.0
      %1358 = vmatprep.subr.mxu0 0.0
      %1359 = vmatpush2.msra.mxu0 0.0
      %1360 = vmatprep.subr.mxu0 0.0
      %1361 = vmatpush2.msra.mxu0 0.0
      %1362 = vmatprep.subr.mxu0 0.0
      %1363 = vmatpush2.msra.mxu0 0.0
      %1364 = vmatprep.subr.mxu0 0.0
      %1365 = vmatpush2.msra.mxu0 0.0
      %1366 = vmatprep.subr.mxu0 0.0
      %1367 = vmatpush2.msra.mxu0 0.0
      %1368 = vmatprep.subr.mxu0 0.0
      %1369 = vmatpush2.msra.mxu0 0.0
      %1370 = vmatprep.subr.mxu0 0.0
      %1371 = vmatpush2.msra.mxu0 0.0
      %1372 = vmatprep.subr.mxu0 0.0
      %1373 = vmatpush2.msra.mxu0 0.0
      %1374 = vmatprep.subr.mxu0 0.0
      %1375 = vmatpush2.msra.mxu0 0.0
      %1376 = vmatprep.subr.mxu0 0.0
      %1377 = vmatpush2.msra.mxu0 0.0
      %1378 = vmatprep.subr.mxu0 0.0
      %1379 = vmatpush2.msra.mxu0 0.0
      %1380 = vmatprep.subr.mxu0 0.0
      %1381 = vmatpush2.msra.mxu0 0.0
      %1382 = vmatprep.subr.mxu0 0.0
      %1383 = vmatpush2.msra.mxu0 0.0
      %1384 = vmatprep.subr.mxu0 0.0
      %1385 = vmatpush2.msra.mxu0 0.0
      %1386 = vmatprep.mubr.f32.mxu0 0.0
      %1387 = vmatmul.mubr.f32.gmra.mxu0 %v1316
      %v1388 = vpop.f32.mrf.mxu0
      %v1389 = vadd.f32 %v1312, %v1388
      %v1390 = vpop.f32.mrf.mxu0
      %1391 = vdwg.mxu0
      %vm1392 = vcmp.ge.f32.partialorder %v1389, 0.0
      %v1393 = vld [vmem:[%s273] sm:$0xf]
      %1395 = vset.pattern.permute.xlu0 0
      %1396 = vperm.xlu0 %1395, %v1393
      %v1397 = vpop.permute.xlu0 %1396
      %v1399 = vmul.f32 %v1397, %v1389
      %v1400 = vsel %vm1392, %v1389, %v1399
      %1401 = vst [vmem:[%s285] sm:$0xf] %v1400
      %p1402 = scmp.lt.s32.totalorder %s20, 1
      %s1403 = scalar_select %p1402, %s20, 1
      %p1404 = scmp.lt.s32.totalorder %s21, 0
      %s1405 = scalar_select %p1404, %s21, 0
      %p1406 = scmp.lt.s32.totalorder %s22, 1
      %s1407 = scalar_select %p1406, %s22, 1
      %s1408 = smul.addr %s1405, 2
      %s1409 = sadd.s32 %s1407, %s1408
      %s1410 = smul.addr %s1403, 2
      %s1411 = sadd.s32 %s1409, %s1410
      %s1412 = smul.addr %s1411, 4
      %s1413 = scalar_lea.vmem %s4, %s1412
      // Predicated region
      $region37: #{repblock_forward.1} parent=35 // pred_check
        %p1414 = pneg %p160
      $region38: #{repblock_forward.1} parent=35 // pred_check_branch
        %1416 = sbr.rel (%p1414) target = $region40
      $region39: #{repblock_forward.1} parent=35 // pred_region
        _
      $region40: #{repblock_forward.1} parent=35 // pred_fallthru
        _
    $region36: #{repblock_forward.1} parent=5 // pred_fallthru
      _
    %p1417 = scmp.le.s32.totalorder 2, %s10
    // Predicated region
    $region41: #{repblock_forward.1} parent=5 // pred_check
      %p1418 = pneg %p1417
    $region42: #{repblock_forward.1} parent=5 // pred_check_branch
      %1420 = sbr.rel (%p1418) target = $region44
    $region43: #{repblock_forward.1} parent=5 // pred_region
      %s1421 = ssub.s32 %s10, 2
      // Predicated region
      $region45: #{repblock_forward.1} parent=43 // pred_check
        %p1422 = pneg %p166
      $region46: #{repblock_forward.1} parent=43 // pred_check_branch
        %1424 = sbr.rel (%p1422) target = $region48
      $region47: #{repblock_forward.1} parent=43 // pred_region
        %p1425 = scmp.lt.s32.totalorder %s23, 1
        %s1426 = scalar_select %p1425, %s23, 1
        %p1427 = scmp.lt.s32.totalorder %s24, 0
        %s1428 = scalar_select %p1427, %s24, 0
        %p1429 = scmp.lt.s32.totalorder %s25, 1
        %s1430 = scalar_select %p1429, %s25, 1
        %s1431 = smul.addr %s1428, 2
        %s1432 = sadd.s32 %s1430, %s1431
        %s1433 = smul.addr %s1426, 2
        %s1434 = sadd.s32 %s1432, %s1433
        %s1435 = smul.addr %s1434, 4
        %s1436 = scalar_lea.vmem %s4, %s1435
      $region48: #{repblock_forward.1} parent=43 // pred_fallthru
        _
    $region44: #{repblock_forward.1} parent=5 // pred_fallthru
      _
  $region6: #{repblock_forward.1} parent=0 // loop_footer
    %s14 = sadd.s32 1, %s10
  $region7: #{repblock_forward.1} parent=0 // loop_footer_branch
    %9 = sbr.rel target = $region3
  $region8: #{repblock_forward.1} parent=0 // loop_exit
    _

</llo_original>
